<compile_context>
chip_gen: v5e
topology: v5e:2x2
jax: 0.10.0
libtpu: 0.0.40
codegen_flags: <defaults>
</compile_context>

<pallas_src>
import jax
import jax.numpy as jnp
from jax.experimental import pallas as pl
from jax.experimental.pallas import tpu as pltpu

# ----------------------------- model dims (hard-coded in the module) --------
D_IN = 28 * 28          # 784
D1, D2, D3 = 512, 256, 128
N_CLASSES = 10
N_OUT_PAD = 128         # last layer padded to a lane-dense 128-wide output


def _softplus(x):
    # Numerically-stable softplus, matches torch.nn.Softplus (beta=1).
    return jnp.maximum(x, 0.0) + jnp.log1p(jnp.exp(-jnp.abs(x)))


def ff_mlp_kernel(x_ref,
                  w1_ref, b1_ref,
                  w2_ref, b2_ref,
                  w3_ref, b3_ref,
                  w4_ref, b4_ref,
                  out_ref):
    """Whole MLP (3x Linear+Softplus, 1x Linear) for one batch tile in VMEM.

    Matmul inputs are bf16 (MXU-native), accumulation is f32; softplus runs in
    f32 on the VPU/EUP and the result is cast back to bf16 for the next dot.
    """
    h = jnp.dot(x_ref[...], w1_ref[...],
                preferred_element_type=jnp.float32) + b1_ref[...]   # (tb, 512) f32
    h = _softplus(h).astype(jnp.bfloat16)
    h = jnp.dot(h, w2_ref[...],
                preferred_element_type=jnp.float32) + b2_ref[...]   # (tb, 256) f32
    h = _softplus(h).astype(jnp.bfloat16)
    h = jnp.dot(h, w3_ref[...],
                preferred_element_type=jnp.float32) + b3_ref[...]   # (tb, 128) f32
    h = _softplus(h).astype(jnp.bfloat16)
    out_ref[...] = (
        jnp.dot(h, w4_ref[...], preferred_element_type=jnp.float32) + b4_ref[...]
    )                                                               # (tb, 128) f32


def _select_tb(B, max_tb=512):
    """Pick the batch tile.

    - small batch: one grid step (latency-bound on the one-time weight DMA)
    - B >= 256   : at least 2 parallel steps so v7x's 2 TensorCores both work
    - large batch: cap at max_tb rows/step (MXU full, overhead amortized)
    """
    if B <= max_tb:
        if B >= 256 and B % 16 == 0:
            return B // 2
        return B
    return max_tb


def unsupervised_ff_forward(image, params, *, max_tb=512):
    """image: (B, 1, 28, 28) float32 -> logits (B, 10) float32."""
    B = image.shape[0]
    x = image.reshape(B, -1).astype(jnp.float32)      # torch reshape (B,1,-1); 1-axis dropped

    tb = _select_tb(B, max_tb)
    n_steps = pl.cdiv(B, tb)
    Bp = n_steps * tb
    if Bp != B:
        x = jnp.pad(x, ((0, Bp - B), (0, 0)))         # zero-pad batch to tile multiple
    x = x.astype(jnp.bfloat16)                        # bf16 MXU input, halves x DMA

    (w1, b1), (w2, b2), (w3, b3), (w4, b4) = params

    # Lane-dense last layer: pad 10 -> 128 output columns with zeros.
    w4p = jnp.zeros((D3, N_OUT_PAD), jnp.float32).at[:, :N_CLASSES].set(w4)
    b4p = jnp.zeros((1, N_OUT_PAD), jnp.float32).at[0, :N_CLASSES].set(b4)

    # bf16 weights (MXU-native), f32 biases added post-accumulation.
    w1b = w1.astype(jnp.bfloat16)
    w2b = w2.astype(jnp.bfloat16)
    w3b = w3.astype(jnp.bfloat16)
    w4b = w4p.astype(jnp.bfloat16)
    b1r = b1.reshape(1, -1).astype(jnp.float32)
    b2r = b2.reshape(1, -1).astype(jnp.float32)
    b3r = b3.reshape(1, -1).astype(jnp.float32)

    full = lambda shape: pl.BlockSpec(shape, lambda i: (0, 0))   # whole-array, grid-invariant

    logits = pl.pallas_call(
        ff_mlp_kernel,
        out_shape=jax.ShapeDtypeStruct((Bp, N_OUT_PAD), jnp.float32),
        grid_spec=pltpu.PrefetchScalarGridSpec(
            num_scalar_prefetch=0,
            grid=(n_steps,),
            in_specs=[
                pl.BlockSpec((tb, D_IN), lambda i: (i, 0)),      # x tile
                full((D_IN, D1)), full((1, D1)),
                full((D1, D2)),   full((1, D2)),
                full((D2, D3)),   full((1, D3)),
                full((D3, N_OUT_PAD)), full((1, N_OUT_PAD)),
            ],
            out_specs=pl.BlockSpec((tb, N_OUT_PAD), lambda i: (i, 0)),
        ),
        compiler_params=pltpu.CompilerParams(
            dimension_semantics=("parallel",),   # batch axis shards across TCs on v7x
        ),
    )(x, w1b, b1r, w2b, b2r, w3b, b3r, w4b, b4p)

    # Drop batch padding and the 118 zero output lanes; torch's .squeeze()
    # on (B,1,10) -> (B,10) (or (10,) for B==1).
    return jnp.squeeze(logits[:B, :N_CLASSES])


def init_params(key):
    """Deterministic init mimicking torch.nn.Linear (uniform(-1/sqrt(fan_in), ...))."""
    dims = [(D_IN, D1), (D1, D2), (D2, D3), (D3, N_CLASSES)]
    params = []
    for (fan_in, fan_out) in dims:
        key, kw, kb = jax.random.split(key, 3)
        bound = 1.0 / jnp.sqrt(fan_in)
        w = jax.random.uniform(kw, (fan_in, fan_out), jnp.float32, -bound, bound)
        b = jax.random.uniform(kb, (fan_out,), jnp.float32, -bound, bound)
        params.append((w, b))
    return params


def reference_forward(image, params):
    """Plain-JAX reference mirroring the kernel's bf16-matmul / f32-accumulate."""
    h = image.reshape(image.shape[0], -1).astype(jnp.float32).astype(jnp.bfloat16)
    for i, (w, b) in enumerate(params):
        h = jnp.dot(h, w.astype(jnp.bfloat16),
                    preferred_element_type=jnp.float32) + b
        if i < 3:
            h = _softplus(h).astype(jnp.bfloat16)
    return h


if __name__ == "__main__":
    key = jax.random.PRNGKey(0)
    key, k_img = jax.random.split(key)

    B = 8
    image = jax.random.normal(k_img, (B, 1, 28, 28), dtype=jnp.float32)
    params = init_params(key)

    logits = unsupervised_ff_forward(image, params)
    logits = jax.block_until_ready(logits)

    ref = reference_forward(image, params)
    assert logits.shape == (B, N_CLASSES), logits.shape
    max_err = float(jnp.max(jnp.abs(logits - ref)))
    assert max_err < 1e-2, max_err
    print("KERNEL_OK")
</pallas_src>

<mosaic_0001>
module attributes {stable_mosaic.version = 11 : i64} {
  func.func @ff_mlp_kernel(%arg0: i32, %arg1: memref<8x784xbf16, #tpu.memory_space<vmem>>, %arg2: memref<784x512xbf16, #tpu.memory_space<vmem>>, %arg3: memref<1x512xf32, #tpu.memory_space<vmem>>, %arg4: memref<512x256xbf16, #tpu.memory_space<vmem>>, %arg5: memref<1x256xf32, #tpu.memory_space<vmem>>, %arg6: memref<256x128xbf16, #tpu.memory_space<vmem>>, %arg7: memref<1x128xf32, #tpu.memory_space<vmem>>, %arg8: memref<128x128xbf16, #tpu.memory_space<vmem>>, %arg9: memref<1x128xf32, #tpu.memory_space<vmem>>, %arg10: memref<8x128xf32, #tpu.memory_space<vmem>>) attributes {dimension_semantics = [#tpu.dimension_semantics<parallel>], iteration_bounds = array<i64: 1>, scalar_prefetch = 0 : i64, scratch_operands = 0 : i64, tpu.core_type = #tpu.core_type<tc>, window_params = [{transform_indices = @transform_0, window_bounds = array<i64: 8, 784>}, {pipeline_mode = #tpu.pipeline_mode<synchronous>, transform_indices = @transform_1, window_bounds = array<i64: 784, 512>}, {pipeline_mode = #tpu.pipeline_mode<synchronous>, transform_indices = @transform_2, window_bounds = array<i64: 1, 512>}, {pipeline_mode = #tpu.pipeline_mode<synchronous>, transform_indices = @transform_3, window_bounds = array<i64: 512, 256>}, {pipeline_mode = #tpu.pipeline_mode<synchronous>, transform_indices = @transform_4, window_bounds = array<i64: 1, 256>}, {pipeline_mode = #tpu.pipeline_mode<synchronous>, transform_indices = @transform_5, window_bounds = array<i64: 256, 128>}, {pipeline_mode = #tpu.pipeline_mode<synchronous>, transform_indices = @transform_6, window_bounds = array<i64: 1, 128>}, {pipeline_mode = #tpu.pipeline_mode<synchronous>, transform_indices = @transform_7, window_bounds = array<i64: 128, 128>}, {pipeline_mode = #tpu.pipeline_mode<synchronous>, transform_indices = @transform_8, window_bounds = array<i64: 1, 128>}, {transform_indices = @transform_9, window_bounds = array<i64: 8, 128>}]} {
    %c0 = arith.constant 0 : index
    %c0_0 = arith.constant 0 : index
    %0 = vector.load %arg1[%c0, %c0_0] : memref<8x784xbf16, #tpu.memory_space<vmem>>, vector<8x784xbf16>
    %c0_1 = arith.constant 0 : index
    %c0_2 = arith.constant 0 : index
    %1 = vector.load %arg2[%c0_1, %c0_2] : memref<784x512xbf16, #tpu.memory_space<vmem>>, vector<784x512xbf16>
    %cst = arith.constant dense<0.000000e+00> : vector<8x512xf32>
    %2 = tpu.matmul %0, %1, %cst {dimension_numbers = #tpu.dot_dimension_numbers<[1], [0], [0], [1], [0, 0, 1, 1], [], []>} : vector<8x784xbf16>, vector<784x512xbf16>, vector<8x512xf32> -> vector<8x512xf32>
    %c0_3 = arith.constant 0 : index
    %c0_4 = arith.constant 0 : index
    %3 = vector.load %arg3[%c0_3, %c0_4] : memref<1x512xf32, #tpu.memory_space<vmem>>, vector<1x512xf32>
    %4 = vector.broadcast %3 : vector<1x512xf32> to vector<8x512xf32>
    %5 = arith.addf %2, %4 : vector<8x512xf32>
    %cst_5 = arith.constant 0.000000e+00 : f32
    %6 = vector.broadcast %cst_5 : f32 to vector<8x512xf32>
    %7 = arith.maximumf %5, %6 : vector<8x512xf32>
    %8 = math.absf %5 : vector<8x512xf32>
    %cst_6 = arith.constant 0.000000e+00 : f32
    %9 = vector.broadcast %cst_6 : f32 to vector<8x512xf32>
    %10 = arith.subf %9, %8 : vector<8x512xf32>
    %11 = math.exp %10 : vector<8x512xf32>
    %12 = math.log1p %11 : vector<8x512xf32>
    %13 = arith.addf %7, %12 : vector<8x512xf32>
    %14 = arith.truncf %13 : vector<8x512xf32> to vector<8x512xbf16>
    %c0_7 = arith.constant 0 : index
    %c0_8 = arith.constant 0 : index
    %15 = vector.load %arg4[%c0_7, %c0_8] : memref<512x256xbf16, #tpu.memory_space<vmem>>, vector<512x256xbf16>
    %cst_9 = arith.constant dense<0.000000e+00> : vector<8x256xf32>
    %16 = tpu.matmul %14, %15, %cst_9 {dimension_numbers = #tpu.dot_dimension_numbers<[1], [0], [0], [1], [0, 0, 1, 1], [], []>} : vector<8x512xbf16>, vector<512x256xbf16>, vector<8x256xf32> -> vector<8x256xf32>
    %c0_10 = arith.constant 0 : index
    %c0_11 = arith.constant 0 : index
    %17 = vector.load %arg5[%c0_10, %c0_11] : memref<1x256xf32, #tpu.memory_space<vmem>>, vector<1x256xf32>
    %18 = vector.broadcast %17 : vector<1x256xf32> to vector<8x256xf32>
    %19 = arith.addf %16, %18 : vector<8x256xf32>
    %cst_12 = arith.constant 0.000000e+00 : f32
    %20 = vector.broadcast %cst_12 : f32 to vector<8x256xf32>
    %21 = arith.maximumf %19, %20 : vector<8x256xf32>
    %22 = math.absf %19 : vector<8x256xf32>
    %cst_13 = arith.constant 0.000000e+00 : f32
    %23 = vector.broadcast %cst_13 : f32 to vector<8x256xf32>
    %24 = arith.subf %23, %22 : vector<8x256xf32>
    %25 = math.exp %24 : vector<8x256xf32>
    %26 = math.log1p %25 : vector<8x256xf32>
    %27 = arith.addf %21, %26 : vector<8x256xf32>
    %28 = arith.truncf %27 : vector<8x256xf32> to vector<8x256xbf16>
    %c0_14 = arith.constant 0 : index
    %c0_15 = arith.constant 0 : index
    %29 = vector.load %arg6[%c0_14, %c0_15] : memref<256x128xbf16, #tpu.memory_space<vmem>>, vector<256x128xbf16>
    %cst_16 = arith.constant dense<0.000000e+00> : vector<8x128xf32>
    %30 = tpu.matmul %28, %29, %cst_16 {dimension_numbers = #tpu.dot_dimension_numbers<[1], [0], [0], [1], [0, 0, 1, 1], [], []>} : vector<8x256xbf16>, vector<256x128xbf16>, vector<8x128xf32> -> vector<8x128xf32>
    %c0_17 = arith.constant 0 : index
    %c0_18 = arith.constant 0 : index
    %31 = vector.load %arg7[%c0_17, %c0_18] : memref<1x128xf32, #tpu.memory_space<vmem>>, vector<1x128xf32>
    %32 = vector.broadcast %31 : vector<1x128xf32> to vector<8x128xf32>
    %33 = arith.addf %30, %32 : vector<8x128xf32>
    %cst_19 = arith.constant 0.000000e+00 : f32
    %34 = vector.broadcast %cst_19 : f32 to vector<8x128xf32>
    %35 = arith.maximumf %33, %34 : vector<8x128xf32>
    %36 = math.absf %33 : vector<8x128xf32>
    %cst_20 = arith.constant 0.000000e+00 : f32
    %37 = vector.broadcast %cst_20 : f32 to vector<8x128xf32>
    %38 = arith.subf %37, %36 : vector<8x128xf32>
    %39 = math.exp %38 : vector<8x128xf32>
    %40 = math.log1p %39 : vector<8x128xf32>
    %41 = arith.addf %35, %40 : vector<8x128xf32>
    %42 = arith.truncf %41 : vector<8x128xf32> to vector<8x128xbf16>
    %c0_21 = arith.constant 0 : index
    %c0_22 = arith.constant 0 : index
    %43 = vector.load %arg8[%c0_21, %c0_22] : memref<128x128xbf16, #tpu.memory_space<vmem>>, vector<128x128xbf16>
    %cst_23 = arith.constant dense<0.000000e+00> : vector<8x128xf32>
    %44 = tpu.matmul %42, %43, %cst_23 {dimension_numbers = #tpu.dot_dimension_numbers<[1], [0], [0], [1], [0, 0, 1, 1], [], []>} : vector<8x128xbf16>, vector<128x128xbf16>, vector<8x128xf32> -> vector<8x128xf32>
    %c0_24 = arith.constant 0 : index
    %c0_25 = arith.constant 0 : index
    %45 = vector.load %arg9[%c0_24, %c0_25] : memref<1x128xf32, #tpu.memory_space<vmem>>, vector<1x128xf32>
    %46 = vector.broadcast %45 : vector<1x128xf32> to vector<8x128xf32>
    %47 = arith.addf %44, %46 : vector<8x128xf32>
    %c0_26 = arith.constant 0 : index
    %c0_27 = arith.constant 0 : index
    %48 = vector.load %arg10[%c0_26, %c0_27] : memref<8x128xf32, #tpu.memory_space<vmem>>, vector<8x128xf32>
    tpu.vector_store %arg10[%c0_26, %c0_27], %47 {strides = array<i32>} : memref<8x128xf32, #tpu.memory_space<vmem>>, vector<8x128xf32>,
    return
  }
  func.func @transform_0(%arg0: i32) -> (i32, i32) {
    %c0_i32 = arith.constant 0 : i32
    %c0_i32_0 = arith.constant 0 : i32
    return %arg0, %c0_i32 : i32, i32
  }
  func.func @transform_1(%arg0: i32) -> (i32, i32) {
    %c0_i32 = arith.constant 0 : i32
    %c0_i32_0 = arith.constant 0 : i32
    %c0_i32_1 = arith.constant 0 : i32
    return %c0_i32, %c0_i32_0 : i32, i32
  }
  func.func @transform_2(%arg0: i32) -> (i32, i32) {
    %c0_i32 = arith.constant 0 : i32
    %c0_i32_0 = arith.constant 0 : i32
    %c0_i32_1 = arith.constant 0 : i32
    return %c0_i32, %c0_i32_0 : i32, i32
  }
  func.func @transform_3(%arg0: i32) -> (i32, i32) {
    %c0_i32 = arith.constant 0 : i32
    %c0_i32_0 = arith.constant 0 : i32
    %c0_i32_1 = arith.constant 0 : i32
    return %c0_i32, %c0_i32_0 : i32, i32
  }
  func.func @transform_4(%arg0: i32) -> (i32, i32) {
    %c0_i32 = arith.constant 0 : i32
    %c0_i32_0 = arith.constant 0 : i32
    %c0_i32_1 = arith.constant 0 : i32
    return %c0_i32, %c0_i32_0 : i32, i32
  }
  func.func @transform_5(%arg0: i32) -> (i32, i32) {
    %c0_i32 = arith.constant 0 : i32
    %c0_i32_0 = arith.constant 0 : i32
    %c0_i32_1 = arith.constant 0 : i32
    return %c0_i32, %c0_i32_0 : i32, i32
  }
  func.func @transform_6(%arg0: i32) -> (i32, i32) {
    %c0_i32 = arith.constant 0 : i32
    %c0_i32_0 = arith.constant 0 : i32
    %c0_i32_1 = arith.constant 0 : i32
    return %c0_i32, %c0_i32_0 : i32, i32
  }
  func.func @transform_7(%arg0: i32) -> (i32, i32) {
    %c0_i32 = arith.constant 0 : i32
    %c0_i32_0 = arith.constant 0 : i32
    %c0_i32_1 = arith.constant 0 : i32
    return %c0_i32, %c0_i32_0 : i32, i32
  }
  func.func @transform_8(%arg0: i32) -> (i32, i32) {
    %c0_i32 = arith.constant 0 : i32
    %c0_i32_0 = arith.constant 0 : i32
    %c0_i32_1 = arith.constant 0 : i32
    return %c0_i32, %c0_i32_0 : i32, i32
  }
  func.func @transform_9(%arg0: i32) -> (i32, i32) {
    %c0_i32 = arith.constant 0 : i32
    %c0_i32_0 = arith.constant 0 : i32
    return %arg0, %c0_i32 : i32, i32
  }
}

</mosaic_0001>

<llo_original>
// kernel: tpu_custom_call.1
$region0: #{tpu_custom_call.1}
  #allocation0 [shape = 'u32[]', space=smem, size = 0x4, offset = 0x4, fixed_abs, tag = 'smem constant byte address 0x4 - core index']
  #allocation1 [shape = 'u32[72,128]{1,0:T(1,128)}', space=vmem, size = 0x9000, scoped, tag = 'internal scratch']
  %s0 = inlined_call_operand.hbm [shape: bf16[8,784], index: 0, kind: input, shape index: {}]
  %s1 = inlined_call_operand.hbm [shape: bf16[784,512], index: 1, kind: input, shape index: {}]
  %s2 = inlined_call_operand.hbm [shape: f32[1,512], index: 2, kind: input, shape index: {}]
  %s3 = inlined_call_operand.hbm [shape: bf16[512,256], index: 3, kind: input, shape index: {}]
  %s4 = inlined_call_operand.vmem [shape: f32[1,256], index: 4, kind: input, shape index: {}]
  %s5 = inlined_call_operand.hbm [shape: bf16[256,128], index: 5, kind: input, shape index: {}]
  %s6 = inlined_call_operand.vmem [shape: f32[1,128], index: 6, kind: input, shape index: {}]
  %s7 = inlined_call_operand.hbm [shape: bf16[128,128], index: 7, kind: input, shape index: {}]
  %s8 = inlined_call_operand.vmem [shape: f32[1,128], index: 8, kind: input, shape index: {}]
  %s9 = inlined_call_operand.hbm [shape: f32[8,128], index: 9, kind: output, shape index: {}]
  %s10 = sld [smem:[#allocation0]]
  $region70: #{tpu_custom_call.1} parent=0
    _
  %s12 = ssub.s32 1, %s10
  %s13 = scalar_select 0, %s12, %s10
  $region1: #{tpu_custom_call.1} parent=0
    #allocation2 [shape = 'u8[14336]{0}', space=vmem, size = 0x3800, scoped, tag = 'input window, operand 0, single buffered']
    #allocation3 [shape = 's32[1]{0}', space=sflag, size = 0x4, scoped, tag = 'scoped memory for tpu_custom_call.1']
    #allocation4 [shape = 's32[1]{0}', space=sflag, size = 0x4, scoped, tag = 'scoped memory for tpu_custom_call.1']
    #allocation5 [shape = 'u8[802816]{0}', space=vmem, size = 0xc4000, scoped, tag = 'input window, operand 1, single buffered']
    #allocation6 [shape = 's32[1]{0}', space=sflag, size = 0x4, scoped, tag = 'scoped memory for tpu_custom_call.1']
    #allocation7 [shape = 'u8[2048]{0}', space=vmem, size = 0x800, scoped, tag = 'input window, operand 2, single buffered']
    #allocation8 [shape = 'u8[262144]{0}', space=vmem, size = 0x40000, scoped, tag = 'input window, operand 3, single buffered']
    #allocation9 [shape = 's32[1]{0}', space=sflag, size = 0x4, scoped, tag = 'scoped memory for tpu_custom_call.1']
    #allocation10 [shape = 'u8[65536]{0}', space=vmem, size = 0x10000, scoped, tag = 'input window, operand 5, single buffered']
    #allocation11 [shape = 'u8[32768]{0}', space=vmem, size = 0x8000, scoped, tag = 'input window, operand 7, single buffered']
    #allocation12 [shape = 's32[1]{0}', space=sflag, size = 0x4, scoped, tag = 'scoped memory for tpu_custom_call.1']
    #allocation13 [shape = 'u8[4096]{0}', space=vmem, size = 0x1000, scoped, tag = 'output window, operand 0, single buffered']
    %14 = vsyncpa [#allocation3], 0
    %15 = vsyncpa [#allocation6], 0
    %16 = vsyncpa [#allocation9], 0
    %17 = vsyncpa [#allocation12], 0
    %18 = vsyncpa [#allocation4], 0
    // Predicated region
    $region2: #{tpu_custom_call.1} parent=1 // pred_check
      _
    $region3: #{tpu_custom_call.1} parent=1 // pred_check_branch
      %20 = sbr.rel (0) target = $region5
    $region4: #{tpu_custom_call.1} parent=1 // pred_region
      %22 = vsyncadd [#allocation3], 0
      %s24 = sshll.u32 %s0, 4
      %s25 = int_to_ptr.hbm [resolvable:$true] %s24
      %s26 = sshll.u32 [#allocation2], 4
      %s27 = int_to_ptr.vmem [resolvable:$true] %s26
      %29 = dma.hbm_to_vmem [thread:$0]  %s25, 448, %s27, [#allocation3]
    $region5: #{tpu_custom_call.1} parent=1 // pred_fallthru
      _
    // Predicated region
    $region6: #{tpu_custom_call.1} parent=1 // pred_check
      _
    $region7: #{tpu_custom_call.1} parent=1 // pred_check_branch
      %31 = sbr.rel (0) target = $region9
    $region8: #{tpu_custom_call.1} parent=1 // pred_region
      %33 = vsyncadd [#allocation6], 0
      %s34 = sshll.u32 %s1, 4
      %s35 = int_to_ptr.hbm [resolvable:$true] %s34
      %s36 = sshll.u32 [#allocation5], 4
      %s37 = int_to_ptr.vmem [resolvable:$true] %s36
      %42 = dma.hbm_to_vmem [thread:$0]  %s35, 25088, %s37, [#allocation6], 256, 256, 16
    $region9: #{tpu_custom_call.1} parent=1 // pred_fallthru
      _
    // Predicated region
    $region10: #{tpu_custom_call.1} parent=1 // pred_check
      _
    $region11: #{tpu_custom_call.1} parent=1 // pred_check_branch
      %44 = sbr.rel (0) target = $region13
    $region12: #{tpu_custom_call.1} parent=1 // pred_region
      %46 = vsyncadd [#allocation6], 0
      %s48 = sshll.u32 %s2, 4
      %s49 = int_to_ptr.hbm [resolvable:$true] %s48
      %s50 = sshll.u32 [#allocation7], 4
      %s51 = int_to_ptr.vmem [resolvable:$true] %s50
      %53 = dma.hbm_to_vmem [thread:$0]  %s49, 64, %s51, [#allocation6]
    $region13: #{tpu_custom_call.1} parent=1 // pred_fallthru
      _
    // Predicated region
    $region14: #{tpu_custom_call.1} parent=1 // pred_check
      _
    $region15: #{tpu_custom_call.1} parent=1 // pred_check_branch
      %55 = sbr.rel (0) target = $region17
    $region16: #{tpu_custom_call.1} parent=1 // pred_region
      %57 = vsyncadd [#allocation9], 0
      %s58 = sshll.u32 %s3, 4
      %s59 = int_to_ptr.hbm [resolvable:$true] %s58
      %s60 = sshll.u32 [#allocation8], 4
      %s61 = int_to_ptr.vmem [resolvable:$true] %s60
      %66 = dma.hbm_to_vmem [thread:$0]  %s59, 8192, %s61, [#allocation9], 128, 128, 8
    $region17: #{tpu_custom_call.1} parent=1 // pred_fallthru
      _
    // Predicated region
    $region18: #{tpu_custom_call.1} parent=1 // pred_check
      _
    $region19: #{tpu_custom_call.1} parent=1 // pred_check_branch
      %68 = sbr.rel (0) target = $region21
    $region20: #{tpu_custom_call.1} parent=1 // pred_region
      _
    $region21: #{tpu_custom_call.1} parent=1 // pred_fallthru
      _
    // Predicated region
    $region22: #{tpu_custom_call.1} parent=1 // pred_check
      _
    $region23: #{tpu_custom_call.1} parent=1 // pred_check_branch
      %70 = sbr.rel (0) target = $region25
    $region24: #{tpu_custom_call.1} parent=1 // pred_region
      %72 = vsyncadd [#allocation9], 0
      %s73 = sshll.u32 %s5, 4
      %s74 = int_to_ptr.hbm [resolvable:$true] %s73
      %s75 = sshll.u32 [#allocation10], 4
      %s76 = int_to_ptr.vmem [resolvable:$true] %s75
      %81 = dma.hbm_to_vmem [thread:$0]  %s74, 2048, %s76, [#allocation9], 64, 64, 4
    $region25: #{tpu_custom_call.1} parent=1 // pred_fallthru
      _
    // Predicated region
    $region26: #{tpu_custom_call.1} parent=1 // pred_check
      _
    $region27: #{tpu_custom_call.1} parent=1 // pred_check_branch
      %83 = sbr.rel (0) target = $region29
    $region28: #{tpu_custom_call.1} parent=1 // pred_region
      _
    $region29: #{tpu_custom_call.1} parent=1 // pred_fallthru
      _
    // Predicated region
    $region30: #{tpu_custom_call.1} parent=1 // pred_check
      _
    $region31: #{tpu_custom_call.1} parent=1 // pred_check_branch
      %85 = sbr.rel (0) target = $region33
    $region32: #{tpu_custom_call.1} parent=1 // pred_region
      %87 = vsyncadd [#allocation12], 0
      %s88 = sshll.u32 %s7, 4
      %s89 = int_to_ptr.hbm [resolvable:$true] %s88
      %s90 = sshll.u32 [#allocation11], 4
      %s91 = int_to_ptr.vmem [resolvable:$true] %s90
      %96 = dma.hbm_to_vmem [thread:$0]  %s89, 1024, %s91, [#allocation12], 64, 64, 4
    $region33: #{tpu_custom_call.1} parent=1 // pred_fallthru
      _
    // Predicated region
    $region34: #{tpu_custom_call.1} parent=1 // pred_check
      _
    $region35: #{tpu_custom_call.1} parent=1 // pred_check_branch
      %98 = sbr.rel (0) target = $region37
    $region36: #{tpu_custom_call.1} parent=1 // pred_region
      _
    $region37: #{tpu_custom_call.1} parent=1 // pred_fallthru
      _
    // Predicated region
    $region38: #{tpu_custom_call.1} parent=1 // pred_check
      _
    $region39: #{tpu_custom_call.1} parent=1 // pred_check_branch
      %100 = sbr.rel (0) target = $region41
    $region40: #{tpu_custom_call.1} parent=1 // pred_region
      %102 = dma.done [#allocation3], 448
    $region41: #{tpu_custom_call.1} parent=1 // pred_fallthru
      _
    // Predicated region
    $region42: #{tpu_custom_call.1} parent=1 // pred_check
      _
    $region43: #{tpu_custom_call.1} parent=1 // pred_check_branch
      %104 = sbr.rel (0) target = $region45
    $region44: #{tpu_custom_call.1} parent=1 // pred_region
      %106 = dma.done [#allocation6], 25088
    $region45: #{tpu_custom_call.1} parent=1 // pred_fallthru
      _
    // Predicated region
    $region46: #{tpu_custom_call.1} parent=1 // pred_check
      _
    $region47: #{tpu_custom_call.1} parent=1 // pred_check_branch
      %108 = sbr.rel (0) target = $region49
    $region48: #{tpu_custom_call.1} parent=1 // pred_region
      %110 = dma.done [#allocation6], 64
    $region49: #{tpu_custom_call.1} parent=1 // pred_fallthru
      _
    // Predicated region
    $region50: #{tpu_custom_call.1} parent=1 // pred_check
      _
    $region51: #{tpu_custom_call.1} parent=1 // pred_check_branch
      %112 = sbr.rel (0) target = $region53
    $region52: #{tpu_custom_call.1} parent=1 // pred_region
      %114 = dma.done [#allocation9], 8192
    $region53: #{tpu_custom_call.1} parent=1 // pred_fallthru
      _
    // Predicated region
    $region54: #{tpu_custom_call.1} parent=1 // pred_check
      _
    $region55: #{tpu_custom_call.1} parent=1 // pred_check_branch
      %116 = sbr.rel (0) target = $region57
    $region56: #{tpu_custom_call.1} parent=1 // pred_region
      %118 = dma.done [#allocation9], 2048
    $region57: #{tpu_custom_call.1} parent=1 // pred_fallthru
      _
    // Predicated region
    $region58: #{tpu_custom_call.1} parent=1 // pred_check
      _
    $region59: #{tpu_custom_call.1} parent=1 // pred_check_branch
      %120 = sbr.rel (0) target = $region61
    $region60: #{tpu_custom_call.1} parent=1 // pred_region
      %122 = dma.done [#allocation12], 1024
    $region61: #{tpu_custom_call.1} parent=1 // pred_fallthru
      _
    %v124 = vld [vmem:[#allocation2] sm:$0xff]
    %v125 = vld [vmem:[#allocation2 + $0x8] sm:$0xff]
    %v126 = vld [vmem:[#allocation2 + $0x10] sm:$0xff]
    %v127 = vld [vmem:[#allocation2 + $0x18] sm:$0xf]
    %v128 = vld [vmem:[#allocation5] sm:$0xff]
    %v129 = vld [vmem:[#allocation5 + $0x8] sm:$0xff]
    %v130 = vld [vmem:[#allocation5 + $0x10] sm:$0xff]
    %v131 = vld [vmem:[#allocation5 + $0x18] sm:$0xff]
    %v132 = vld [vmem:[#allocation5 + $0x20] sm:$0xff]
    %v133 = vld [vmem:[#allocation5 + $0x28] sm:$0xff]
    %v134 = vld [vmem:[#allocation5 + $0x30] sm:$0xff]
    %v135 = vld [vmem:[#allocation5 + $0x38] sm:$0xff]
    %v136 = vld [vmem:[#allocation5 + $0x40] sm:$0xff]
    %v137 = vld [vmem:[#allocation5 + $0x48] sm:$0xff]
    %v138 = vld [vmem:[#allocation5 + $0x50] sm:$0xff]
    %v139 = vld [vmem:[#allocation5 + $0x58] sm:$0xff]
    %v140 = vld [vmem:[#allocation5 + $0x60] sm:$0xff]
    %v141 = vld [vmem:[#allocation5 + $0x68] sm:$0xff]
    %v142 = vld [vmem:[#allocation5 + $0x70] sm:$0xff]
    %v143 = vld [vmem:[#allocation5 + $0x78] sm:$0xff]
    %v144 = vld [vmem:[#allocation5 + $0x80] sm:$0xff]
    %v145 = vld [vmem:[#allocation5 + $0x88] sm:$0xff]
    %v146 = vld [vmem:[#allocation5 + $0x90] sm:$0xff]
    %v147 = vld [vmem:[#allocation5 + $0x98] sm:$0xff]
    %v148 = vld [vmem:[#allocation5 + $0xa0] sm:$0xff]
    %v149 = vld [vmem:[#allocation5 + $0xa8] sm:$0xff]
    %v150 = vld [vmem:[#allocation5 + $0xb0] sm:$0xff]
    %v151 = vld [vmem:[#allocation5 + $0xb8] sm:$0xff]
    %v152 = vld [vmem:[#allocation5 + $0xc0] sm:$0xff]
    %v153 = vld [vmem:[#allocation5 + $0xc8] sm:$0xff]
    %v154 = vld [vmem:[#allocation5 + $0xd0] sm:$0xff]
    %v155 = vld [vmem:[#allocation5 + $0xd8] sm:$0xff]
    %v156 = vld [vmem:[#allocation5 + $0xe0] sm:$0xff]
    %v157 = vld [vmem:[#allocation5 + $0xe8] sm:$0xff]
    %v158 = vld [vmem:[#allocation5 + $0xf0] sm:$0xff]
    %v159 = vld [vmem:[#allocation5 + $0xf8] sm:$0xff]
    %v160 = vld [vmem:[#allocation5 + $0x100] sm:$0xff]
    %v161 = vld [vmem:[#allocation5 + $0x108] sm:$0xff]
    %v162 = vld [vmem:[#allocation5 + $0x110] sm:$0xff]
    %v163 = vld [vmem:[#allocation5 + $0x118] sm:$0xff]
    %v164 = vld [vmem:[#allocation5 + $0x120] sm:$0xff]
    %v165 = vld [vmem:[#allocation5 + $0x128] sm:$0xff]
    %v166 = vld [vmem:[#allocation5 + $0x130] sm:$0xff]
    %v167 = vld [vmem:[#allocation5 + $0x138] sm:$0xff]
    %v168 = vld [vmem:[#allocation5 + $0x140] sm:$0xff]
    %v169 = vld [vmem:[#allocation5 + $0x148] sm:$0xff]
    %v170 = vld [vmem:[#allocation5 + $0x150] sm:$0xff]
    %v171 = vld [vmem:[#allocation5 + $0x158] sm:$0xff]
    %v172 = vld [vmem:[#allocation5 + $0x160] sm:$0xff]
    %v173 = vld [vmem:[#allocation5 + $0x168] sm:$0xff]
    %v174 = vld [vmem:[#allocation5 + $0x170] sm:$0xff]
    %v175 = vld [vmem:[#allocation5 + $0x178] sm:$0xff]
    %v176 = vld [vmem:[#allocation5 + $0x180] sm:$0xff]
    %v177 = vld [vmem:[#allocation5 + $0x188] sm:$0xff]
    %v178 = vld [vmem:[#allocation5 + $0x190] sm:$0xff]
    %v179 = vld [vmem:[#allocation5 + $0x198] sm:$0xff]
    %v180 = vld [vmem:[#allocation5 + $0x1a0] sm:$0xff]
    %v181 = vld [vmem:[#allocation5 + $0x1a8] sm:$0xff]
    %v182 = vld [vmem:[#allocation5 + $0x1b0] sm:$0xff]
    %v183 = vld [vmem:[#allocation5 + $0x1b8] sm:$0xff]
    %v184 = vld [vmem:[#allocation5 + $0x1c0] sm:$0xff]
    %v185 = vld [vmem:[#allocation5 + $0x1c8] sm:$0xff]
    %v186 = vld [vmem:[#allocation5 + $0x1d0] sm:$0xff]
    %v187 = vld [vmem:[#allocation5 + $0x1d8] sm:$0xff]
    %v188 = vld [vmem:[#allocation5 + $0x1e0] sm:$0xff]
    %v189 = vld [vmem:[#allocation5 + $0x1e8] sm:$0xff]
    %v190 = vld [vmem:[#allocation5 + $0x1f0] sm:$0xff]
    %v191 = vld [vmem:[#allocation5 + $0x1f8] sm:$0xff]
    %v192 = vld [vmem:[#allocation5 + $0x200] sm:$0xff]
    %v193 = vld [vmem:[#allocation5 + $0x208] sm:$0xff]
    %v194 = vld [vmem:[#allocation5 + $0x210] sm:$0xff]
    %v195 = vld [vmem:[#allocation5 + $0x218] sm:$0xff]
    %v196 = vld [vmem:[#allocation5 + $0x220] sm:$0xff]
    %v197 = vld [vmem:[#allocation5 + $0x228] sm:$0xff]
    %v198 = vld [vmem:[#allocation5 + $0x230] sm:$0xff]
    %v199 = vld [vmem:[#allocation5 + $0x238] sm:$0xff]
    %v200 = vld [vmem:[#allocation5 + $0x240] sm:$0xff]
    %v201 = vld [vmem:[#allocation5 + $0x248] sm:$0xff]
    %v202 = vld [vmem:[#allocation5 + $0x250] sm:$0xff]
    %v203 = vld [vmem:[#allocation5 + $0x258] sm:$0xff]
    %v204 = vld [vmem:[#allocation5 + $0x260] sm:$0xff]
    %v205 = vld [vmem:[#allocation5 + $0x268] sm:$0xff]
    %v206 = vld [vmem:[#allocation5 + $0x270] sm:$0xff]
    %v207 = vld [vmem:[#allocation5 + $0x278] sm:$0xff]
    %v208 = vld [vmem:[#allocation5 + $0x280] sm:$0xff]
    %v209 = vld [vmem:[#allocation5 + $0x288] sm:$0xff]
    %v210 = vld [vmem:[#allocation5 + $0x290] sm:$0xff]
    %v211 = vld [vmem:[#allocation5 + $0x298] sm:$0xff]
    %v212 = vld [vmem:[#allocation5 + $0x2a0] sm:$0xff]
    %v213 = vld [vmem:[#allocation5 + $0x2a8] sm:$0xff]
    %v214 = vld [vmem:[#allocation5 + $0x2b0] sm:$0xff]
    %v215 = vld [vmem:[#allocation5 + $0x2b8] sm:$0xff]
    %v216 = vld [vmem:[#allocation5 + $0x2c0] sm:$0xff]
    %v217 = vld [vmem:[#allocation5 + $0x2c8] sm:$0xff]
    %v218 = vld [vmem:[#allocation5 + $0x2d0] sm:$0xff]
    %v219 = vld [vmem:[#allocation5 + $0x2d8] sm:$0xff]
    %v220 = vld [vmem:[#allocation5 + $0x2e0] sm:$0xff]
    %v221 = vld [vmem:[#allocation5 + $0x2e8] sm:$0xff]
    %v222 = vld [vmem:[#allocation5 + $0x2f0] sm:$0xff]
    %v223 = vld [vmem:[#allocation5 + $0x2f8] sm:$0xff]
    %v224 = vld [vmem:[#allocation5 + $0x300] sm:$0xff]
    %v225 = vld [vmem:[#allocation5 + $0x308] sm:$0xff]
    %v226 = vld [vmem:[#allocation5 + $0x310] sm:$0xff]
    %v227 = vld [vmem:[#allocation5 + $0x318] sm:$0xff]
    %v228 = vld [vmem:[#allocation5 + $0x320] sm:$0xff]
    %v229 = vld [vmem:[#allocation5 + $0x328] sm:$0xff]
    %v230 = vld [vmem:[#allocation5 + $0x330] sm:$0xff]
    %v231 = vld [vmem:[#allocation5 + $0x338] sm:$0xff]
    %v232 = vld [vmem:[#allocation5 + $0x340] sm:$0xff]
    %v233 = vld [vmem:[#allocation5 + $0x348] sm:$0xff]
    %v234 = vld [vmem:[#allocation5 + $0x350] sm:$0xff]
    %v235 = vld [vmem:[#allocation5 + $0x358] sm:$0xff]
    %v236 = vld [vmem:[#allocation5 + $0x360] sm:$0xff]
    %v237 = vld [vmem:[#allocation5 + $0x368] sm:$0xff]
    %v238 = vld [vmem:[#allocation5 + $0x370] sm:$0xff]
    %v239 = vld [vmem:[#allocation5 + $0x378] sm:$0xff]
    %v240 = vld [vmem:[#allocation5 + $0x380] sm:$0xff]
    %v241 = vld [vmem:[#allocation5 + $0x388] sm:$0xff]
    %v242 = vld [vmem:[#allocation5 + $0x390] sm:$0xff]
    %v243 = vld [vmem:[#allocation5 + $0x398] sm:$0xff]
    %v244 = vld [vmem:[#allocation5 + $0x3a0] sm:$0xff]
    %v245 = vld [vmem:[#allocation5 + $0x3a8] sm:$0xff]
    %v246 = vld [vmem:[#allocation5 + $0x3b0] sm:$0xff]
    %v247 = vld [vmem:[#allocation5 + $0x3b8] sm:$0xff]
    %v248 = vld [vmem:[#allocation5 + $0x3c0] sm:$0xff]
    %v249 = vld [vmem:[#allocation5 + $0x3c8] sm:$0xff]
    %v250 = vld [vmem:[#allocation5 + $0x3d0] sm:$0xff]
    %v251 = vld [vmem:[#allocation5 + $0x3d8] sm:$0xff]
    %v252 = vld [vmem:[#allocation5 + $0x3e0] sm:$0xff]
    %v253 = vld [vmem:[#allocation5 + $0x3e8] sm:$0xff]
    %v254 = vld [vmem:[#allocation5 + $0x3f0] sm:$0xff]
    %v255 = vld [vmem:[#allocation5 + $0x3f8] sm:$0xff]
    %v256 = vld [vmem:[#allocation5 + $0x400] sm:$0xff]
    %v257 = vld [vmem:[#allocation5 + $0x408] sm:$0xff]
    %v258 = vld [vmem:[#allocation5 + $0x410] sm:$0xff]
    %v259 = vld [vmem:[#allocation5 + $0x418] sm:$0xff]
    %v260 = vld [vmem:[#allocation5 + $0x420] sm:$0xff]
    %v261 = vld [vmem:[#allocation5 + $0x428] sm:$0xff]
    %v262 = vld [vmem:[#allocation5 + $0x430] sm:$0xff]
    %v263 = vld [vmem:[#allocation5 + $0x438] sm:$0xff]
    %v264 = vld [vmem:[#allocation5 + $0x440] sm:$0xff]
    %v265 = vld [vmem:[#allocation5 + $0x448] sm:$0xff]
    %v266 = vld [vmem:[#allocation5 + $0x450] sm:$0xff]
    %v267 = vld [vmem:[#allocation5 + $0x458] sm:$0xff]
    %v268 = vld [vmem:[#allocation5 + $0x460] sm:$0xff]
    %v269 = vld [vmem:[#allocation5 + $0x468] sm:$0xff]
    %v270 = vld [vmem:[#allocation5 + $0x470] sm:$0xff]
    %v271 = vld [vmem:[#allocation5 + $0x478] sm:$0xff]
    %v272 = vld [vmem:[#allocation5 + $0x480] sm:$0xff]
    %v273 = vld [vmem:[#allocation5 + $0x488] sm:$0xff]
    %v274 = vld [vmem:[#allocation5 + $0x490] sm:$0xff]
    %v275 = vld [vmem:[#allocation5 + $0x498] sm:$0xff]
    %v276 = vld [vmem:[#allocation5 + $0x4a0] sm:$0xff]
    %v277 = vld [vmem:[#allocation5 + $0x4a8] sm:$0xff]
    %v278 = vld [vmem:[#allocation5 + $0x4b0] sm:$0xff]
    %v279 = vld [vmem:[#allocation5 + $0x4b8] sm:$0xff]
    %v280 = vld [vmem:[#allocation5 + $0x4c0] sm:$0xff]
    %v281 = vld [vmem:[#allocation5 + $0x4c8] sm:$0xff]
    %v282 = vld [vmem:[#allocation5 + $0x4d0] sm:$0xff]
    %v283 = vld [vmem:[#allocation5 + $0x4d8] sm:$0xff]
    %v284 = vld [vmem:[#allocation5 + $0x4e0] sm:$0xff]
    %v285 = vld [vmem:[#allocation5 + $0x4e8] sm:$0xff]
    %v286 = vld [vmem:[#allocation5 + $0x4f0] sm:$0xff]
    %v287 = vld [vmem:[#allocation5 + $0x4f8] sm:$0xff]
    %v288 = vld [vmem:[#allocation5 + $0x500] sm:$0xff]
    %v289 = vld [vmem:[#allocation5 + $0x508] sm:$0xff]
    %v290 = vld [vmem:[#allocation5 + $0x510] sm:$0xff]
    %v291 = vld [vmem:[#allocation5 + $0x518] sm:$0xff]
    %v292 = vld [vmem:[#allocation5 + $0x520] sm:$0xff]
    %v293 = vld [vmem:[#allocation5 + $0x528] sm:$0xff]
    %v294 = vld [vmem:[#allocation5 + $0x530] sm:$0xff]
    %v295 = vld [vmem:[#allocation5 + $0x538] sm:$0xff]
    %v296 = vld [vmem:[#allocation5 + $0x540] sm:$0xff]
    %v297 = vld [vmem:[#allocation5 + $0x548] sm:$0xff]
    %v298 = vld [vmem:[#allocation5 + $0x550] sm:$0xff]
    %v299 = vld [vmem:[#allocation5 + $0x558] sm:$0xff]
    %v300 = vld [vmem:[#allocation5 + $0x560] sm:$0xff]
    %v301 = vld [vmem:[#allocation5 + $0x568] sm:$0xff]
    %v302 = vld [vmem:[#allocation5 + $0x570] sm:$0xff]
    %v303 = vld [vmem:[#allocation5 + $0x578] sm:$0xff]
    %v304 = vld [vmem:[#allocation5 + $0x580] sm:$0xff]
    %v305 = vld [vmem:[#allocation5 + $0x588] sm:$0xff]
    %v306 = vld [vmem:[#allocation5 + $0x590] sm:$0xff]
    %v307 = vld [vmem:[#allocation5 + $0x598] sm:$0xff]
    %v308 = vld [vmem:[#allocation5 + $0x5a0] sm:$0xff]
    %v309 = vld [vmem:[#allocation5 + $0x5a8] sm:$0xff]
    %v310 = vld [vmem:[#allocation5 + $0x5b0] sm:$0xff]
    %v311 = vld [vmem:[#allocation5 + $0x5b8] sm:$0xff]
    %v312 = vld [vmem:[#allocation5 + $0x5c0] sm:$0xff]
    %v313 = vld [vmem:[#allocation5 + $0x5c8] sm:$0xff]
    %v314 = vld [vmem:[#allocation5 + $0x5d0] sm:$0xff]
    %v315 = vld [vmem:[#allocation5 + $0x5d8] sm:$0xff]
    %v316 = vld [vmem:[#allocation5 + $0x5e0] sm:$0xff]
    %v317 = vld [vmem:[#allocation5 + $0x5e8] sm:$0xff]
    %v318 = vld [vmem:[#allocation5 + $0x5f0] sm:$0xff]
    %v319 = vld [vmem:[#allocation5 + $0x5f8] sm:$0xff]
    %v320 = vld [vmem:[#allocation5 + $0x600] sm:$0xff]
    %v321 = vld [vmem:[#allocation5 + $0x608] sm:$0xff]
    %v322 = vld [vmem:[#allocation5 + $0x610] sm:$0xff]
    %v323 = vld [vmem:[#allocation5 + $0x618] sm:$0xff]
    %v324 = vld [vmem:[#allocation7] sm:$0xf]
    %v326 = vperm.slane %v324, 0
    %v327 = vperm.slane %v324, 1
    %v328 = vperm.slane %v324, 2
    %v329 = vperm.slane %v324, 3
    %v338 = vunpack.c.l.b16 %v124
    %v339 = vunpack.c.h.b16 %v124
    %v340 = vunpack.c.l.b16 %v125
    %v341 = vunpack.c.h.b16 %v125
    %v342 = vunpack.c.l.b16 %v126
    %v343 = vunpack.c.h.b16 %v126
    %v344 = vunpack.c.l.b16 %v127
    %v345 = vpack.c.b16 %v338, %v338
    %v346 = vpack.c.b16 %v339, %v339
    %v347 = vpack.c.b16 %v340, %v340
    %v348 = vpack.c.b16 %v341, %v341
    %v349 = vpack.c.b16 %v342, %v342
    %v350 = vpack.c.b16 %v343, %v343
    %v351 = vpack.c.b16 %v344, %v344
    %v554 = vunpack.c.l.b16 %v128
    %v555 = vunpack.c.h.b16 %v128
    %v556 = vunpack.c.l.b16 %v129
    %v557 = vunpack.c.h.b16 %v129
    %v558 = vunpack.c.l.b16 %v130
    %v559 = vunpack.c.h.b16 %v130
    %v560 = vunpack.c.l.b16 %v131
    %v561 = vunpack.c.h.b16 %v131
    %v562 = vunpack.c.l.b16 %v132
    %v563 = vunpack.c.h.b16 %v132
    %v564 = vunpack.c.l.b16 %v133
    %v565 = vunpack.c.h.b16 %v133
    %v566 = vunpack.c.l.b16 %v134
    %v567 = vunpack.c.h.b16 %v134
    %v568 = vunpack.c.l.b16 %v135
    %v569 = vunpack.c.h.b16 %v135
    %v570 = vunpack.c.l.b16 %v136
    %v571 = vunpack.c.h.b16 %v136
    %v572 = vunpack.c.l.b16 %v137
    %v573 = vunpack.c.h.b16 %v137
    %v574 = vunpack.c.l.b16 %v138
    %v575 = vunpack.c.h.b16 %v138
    %v576 = vunpack.c.l.b16 %v139
    %v577 = vunpack.c.h.b16 %v139
    %v578 = vunpack.c.l.b16 %v140
    %v579 = vunpack.c.h.b16 %v140
    %v580 = vunpack.c.l.b16 %v141
    %v581 = vunpack.c.h.b16 %v141
    %v582 = vunpack.c.l.b16 %v142
    %v583 = vunpack.c.h.b16 %v142
    %v584 = vunpack.c.l.b16 %v143
    %v585 = vunpack.c.h.b16 %v143
    %v586 = vunpack.c.l.b16 %v144
    %v587 = vunpack.c.h.b16 %v144
    %v588 = vunpack.c.l.b16 %v145
    %v589 = vunpack.c.h.b16 %v145
    %v590 = vunpack.c.l.b16 %v146
    %v591 = vunpack.c.h.b16 %v146
    %v592 = vunpack.c.l.b16 %v147
    %v593 = vunpack.c.h.b16 %v147
    %v594 = vunpack.c.l.b16 %v148
    %v595 = vunpack.c.h.b16 %v148
    %v596 = vunpack.c.l.b16 %v149
    %v597 = vunpack.c.h.b16 %v149
    %v598 = vunpack.c.l.b16 %v150
    %v599 = vunpack.c.h.b16 %v150
    %v600 = vunpack.c.l.b16 %v151
    %v601 = vunpack.c.h.b16 %v151
    %v602 = vunpack.c.l.b16 %v152
    %v603 = vunpack.c.h.b16 %v152
    %v604 = vunpack.c.l.b16 %v153
    %v605 = vunpack.c.h.b16 %v153
    %v606 = vunpack.c.l.b16 %v154
    %v607 = vunpack.c.h.b16 %v154
    %v608 = vunpack.c.l.b16 %v155
    %v609 = vunpack.c.h.b16 %v155
    %v610 = vunpack.c.l.b16 %v156
    %v611 = vunpack.c.h.b16 %v156
    %v612 = vunpack.c.l.b16 %v157
    %v613 = vunpack.c.h.b16 %v157
    %v614 = vunpack.c.l.b16 %v158
    %v615 = vunpack.c.h.b16 %v158
    %v616 = vunpack.c.l.b16 %v159
    %v617 = vunpack.c.h.b16 %v159
    %v618 = vunpack.c.l.b16 %v160
    %v619 = vunpack.c.h.b16 %v160
    %v620 = vunpack.c.l.b16 %v161
    %v621 = vunpack.c.h.b16 %v161
    %v622 = vunpack.c.l.b16 %v162
    %v623 = vunpack.c.h.b16 %v162
    %v624 = vunpack.c.l.b16 %v163
    %v625 = vunpack.c.h.b16 %v163
    %v626 = vunpack.c.l.b16 %v164
    %v627 = vunpack.c.h.b16 %v164
    %v628 = vunpack.c.l.b16 %v165
    %v629 = vunpack.c.h.b16 %v165
    %v630 = vunpack.c.l.b16 %v166
    %v631 = vunpack.c.h.b16 %v166
    %v632 = vunpack.c.l.b16 %v167
    %v633 = vunpack.c.h.b16 %v167
    %v634 = vunpack.c.l.b16 %v168
    %v635 = vunpack.c.h.b16 %v168
    %v636 = vunpack.c.l.b16 %v169
    %v637 = vunpack.c.h.b16 %v169
    %v638 = vunpack.c.l.b16 %v170
    %v639 = vunpack.c.h.b16 %v170
    %v640 = vunpack.c.l.b16 %v171
    %v641 = vunpack.c.h.b16 %v171
    %v642 = vunpack.c.l.b16 %v172
    %v643 = vunpack.c.h.b16 %v172
    %v644 = vunpack.c.l.b16 %v173
    %v645 = vunpack.c.h.b16 %v173
    %v646 = vunpack.c.l.b16 %v174
    %v647 = vunpack.c.h.b16 %v174
    %v648 = vunpack.c.l.b16 %v175
    %v649 = vunpack.c.h.b16 %v175
    %v650 = vunpack.c.l.b16 %v176
    %v651 = vunpack.c.h.b16 %v176
    %v652 = vunpack.c.l.b16 %v177
    %v653 = vunpack.c.h.b16 %v177
    %v654 = vunpack.c.l.b16 %v178
    %v655 = vunpack.c.h.b16 %v178
    %v656 = vunpack.c.l.b16 %v179
    %v657 = vunpack.c.h.b16 %v179
    %v658 = vunpack.c.l.b16 %v180
    %v659 = vunpack.c.h.b16 %v180
    %v660 = vunpack.c.l.b16 %v181
    %v661 = vunpack.c.h.b16 %v181
    %v662 = vunpack.c.l.b16 %v182
    %v663 = vunpack.c.h.b16 %v182
    %v664 = vunpack.c.l.b16 %v183
    %v665 = vunpack.c.h.b16 %v183
    %v666 = vunpack.c.l.b16 %v184
    %v667 = vunpack.c.h.b16 %v184
    %v668 = vunpack.c.l.b16 %v185
    %v669 = vunpack.c.h.b16 %v185
    %v670 = vunpack.c.l.b16 %v186
    %v671 = vunpack.c.h.b16 %v186
    %v672 = vunpack.c.l.b16 %v187
    %v673 = vunpack.c.h.b16 %v187
    %v674 = vunpack.c.l.b16 %v188
    %v675 = vunpack.c.h.b16 %v188
    %v676 = vunpack.c.l.b16 %v189
    %v677 = vunpack.c.h.b16 %v189
    %v678 = vunpack.c.l.b16 %v190
    %v679 = vunpack.c.h.b16 %v190
    %v680 = vunpack.c.l.b16 %v191
    %v681 = vunpack.c.h.b16 %v191
    %v682 = vunpack.c.l.b16 %v192
    %v683 = vunpack.c.h.b16 %v192
    %v684 = vunpack.c.l.b16 %v193
    %v685 = vunpack.c.h.b16 %v193
    %v686 = vunpack.c.l.b16 %v194
    %v687 = vunpack.c.h.b16 %v194
    %v688 = vunpack.c.l.b16 %v195
    %v689 = vunpack.c.h.b16 %v195
    %v690 = vunpack.c.l.b16 %v196
    %v691 = vunpack.c.h.b16 %v196
    %v692 = vunpack.c.l.b16 %v197
    %v693 = vunpack.c.h.b16 %v197
    %v694 = vunpack.c.l.b16 %v198
    %v695 = vunpack.c.h.b16 %v198
    %v696 = vunpack.c.l.b16 %v199
    %v697 = vunpack.c.h.b16 %v199
    %v698 = vunpack.c.l.b16 %v200
    %v699 = vunpack.c.h.b16 %v200
    %v700 = vunpack.c.l.b16 %v201
    %v701 = vunpack.c.h.b16 %v201
    %v702 = vunpack.c.l.b16 %v202
    %v703 = vunpack.c.h.b16 %v202
    %v704 = vunpack.c.l.b16 %v203
    %v705 = vunpack.c.h.b16 %v203
    %v706 = vunpack.c.l.b16 %v204
    %v707 = vunpack.c.h.b16 %v204
    %v708 = vunpack.c.l.b16 %v205
    %v709 = vunpack.c.h.b16 %v205
    %v710 = vunpack.c.l.b16 %v206
    %v711 = vunpack.c.h.b16 %v206
    %v712 = vunpack.c.l.b16 %v207
    %v713 = vunpack.c.h.b16 %v207
    %v714 = vunpack.c.l.b16 %v208
    %v715 = vunpack.c.h.b16 %v208
    %v716 = vunpack.c.l.b16 %v209
    %v717 = vunpack.c.h.b16 %v209
    %v718 = vunpack.c.l.b16 %v210
    %v719 = vunpack.c.h.b16 %v210
    %v720 = vunpack.c.l.b16 %v211
    %v721 = vunpack.c.h.b16 %v211
    %v722 = vunpack.c.l.b16 %v212
    %v723 = vunpack.c.h.b16 %v212
    %v724 = vunpack.c.l.b16 %v213
    %v725 = vunpack.c.h.b16 %v213
    %v726 = vunpack.c.l.b16 %v214
    %v727 = vunpack.c.h.b16 %v214
    %v728 = vunpack.c.l.b16 %v215
    %v729 = vunpack.c.h.b16 %v215
    %v730 = vunpack.c.l.b16 %v216
    %v731 = vunpack.c.h.b16 %v216
    %v732 = vunpack.c.l.b16 %v217
    %v733 = vunpack.c.h.b16 %v217
    %v734 = vunpack.c.l.b16 %v218
    %v735 = vunpack.c.h.b16 %v218
    %v736 = vunpack.c.l.b16 %v219
    %v737 = vunpack.c.h.b16 %v219
    %v738 = vunpack.c.l.b16 %v220
    %v739 = vunpack.c.h.b16 %v220
    %v740 = vunpack.c.l.b16 %v221
    %v741 = vunpack.c.h.b16 %v221
    %v742 = vunpack.c.l.b16 %v222
    %v743 = vunpack.c.h.b16 %v222
    %v744 = vunpack.c.l.b16 %v223
    %v745 = vunpack.c.h.b16 %v223
    %v746 = vunpack.c.l.b16 %v224
    %v747 = vunpack.c.h.b16 %v224
    %v748 = vunpack.c.l.b16 %v225
    %v749 = vunpack.c.h.b16 %v225
    %v750 = vunpack.c.l.b16 %v226
    %v751 = vunpack.c.h.b16 %v226
    %v752 = vunpack.c.l.b16 %v227
    %v753 = vunpack.c.h.b16 %v227
    %v754 = vunpack.c.l.b16 %v228
    %v755 = vunpack.c.h.b16 %v228
    %v756 = vunpack.c.l.b16 %v229
    %v757 = vunpack.c.h.b16 %v229
    %v758 = vunpack.c.l.b16 %v230
    %v759 = vunpack.c.h.b16 %v230
    %v760 = vunpack.c.l.b16 %v231
    %v761 = vunpack.c.h.b16 %v231
    %v762 = vunpack.c.l.b16 %v232
    %v763 = vunpack.c.h.b16 %v232
    %v764 = vunpack.c.l.b16 %v233
    %v765 = vunpack.c.h.b16 %v233
    %v766 = vunpack.c.l.b16 %v234
    %v767 = vunpack.c.h.b16 %v234
    %v768 = vunpack.c.l.b16 %v235
    %v769 = vunpack.c.h.b16 %v235
    %v770 = vunpack.c.l.b16 %v236
    %v771 = vunpack.c.h.b16 %v236
    %v772 = vunpack.c.l.b16 %v237
    %v773 = vunpack.c.h.b16 %v237
    %v774 = vunpack.c.l.b16 %v238
    %v775 = vunpack.c.h.b16 %v238
    %v776 = vunpack.c.l.b16 %v239
    %v777 = vunpack.c.h.b16 %v239
    %v778 = vunpack.c.l.b16 %v240
    %v779 = vunpack.c.h.b16 %v240
    %v780 = vunpack.c.l.b16 %v241
    %v781 = vunpack.c.h.b16 %v241
    %v782 = vunpack.c.l.b16 %v242
    %v783 = vunpack.c.h.b16 %v242
    %v784 = vunpack.c.l.b16 %v243
    %v785 = vunpack.c.h.b16 %v243
    %v786 = vunpack.c.l.b16 %v244
    %v787 = vunpack.c.h.b16 %v244
    %v788 = vunpack.c.l.b16 %v245
    %v789 = vunpack.c.h.b16 %v245
    %v790 = vunpack.c.l.b16 %v246
    %v791 = vunpack.c.h.b16 %v246
    %v792 = vunpack.c.l.b16 %v247
    %v793 = vunpack.c.h.b16 %v247
    %v794 = vunpack.c.l.b16 %v248
    %v795 = vunpack.c.h.b16 %v248
    %v796 = vunpack.c.l.b16 %v249
    %v797 = vunpack.c.h.b16 %v249
    %v798 = vunpack.c.l.b16 %v250
    %v799 = vunpack.c.h.b16 %v250
    %v800 = vunpack.c.l.b16 %v251
    %v801 = vunpack.c.h.b16 %v251
    %v802 = vunpack.c.l.b16 %v252
    %v803 = vunpack.c.h.b16 %v252
    %v804 = vunpack.c.l.b16 %v253
    %v805 = vunpack.c.h.b16 %v253
    %v806 = vunpack.c.l.b16 %v254
    %v807 = vunpack.c.h.b16 %v254
    %v808 = vunpack.c.l.b16 %v255
    %v809 = vunpack.c.h.b16 %v255
    %v810 = vunpack.c.l.b16 %v256
    %v811 = vunpack.c.h.b16 %v256
    %v812 = vunpack.c.l.b16 %v257
    %v813 = vunpack.c.h.b16 %v257
    %v814 = vunpack.c.l.b16 %v258
    %v815 = vunpack.c.h.b16 %v258
    %v816 = vunpack.c.l.b16 %v259
    %v817 = vunpack.c.h.b16 %v259
    %v818 = vunpack.c.l.b16 %v260
    %v819 = vunpack.c.h.b16 %v260
    %v820 = vunpack.c.l.b16 %v261
    %v821 = vunpack.c.h.b16 %v261
    %v822 = vunpack.c.l.b16 %v262
    %v823 = vunpack.c.h.b16 %v262
    %v824 = vunpack.c.l.b16 %v263
    %v825 = vunpack.c.h.b16 %v263
    %v826 = vunpack.c.l.b16 %v264
    %v827 = vunpack.c.h.b16 %v264
    %v828 = vunpack.c.l.b16 %v265
    %v829 = vunpack.c.h.b16 %v265
    %v830 = vunpack.c.l.b16 %v266
    %v831 = vunpack.c.h.b16 %v266
    %v832 = vunpack.c.l.b16 %v267
    %v833 = vunpack.c.h.b16 %v267
    %v834 = vunpack.c.l.b16 %v268
    %v835 = vunpack.c.h.b16 %v268
    %v836 = vunpack.c.l.b16 %v269
    %v837 = vunpack.c.h.b16 %v269
    %v838 = vunpack.c.l.b16 %v270
    %v839 = vunpack.c.h.b16 %v270
    %v840 = vunpack.c.l.b16 %v271
    %v841 = vunpack.c.h.b16 %v271
    %v842 = vunpack.c.l.b16 %v272
    %v843 = vunpack.c.h.b16 %v272
    %v844 = vunpack.c.l.b16 %v273
    %v845 = vunpack.c.h.b16 %v273
    %v846 = vunpack.c.l.b16 %v274
    %v847 = vunpack.c.h.b16 %v274
    %v848 = vunpack.c.l.b16 %v275
    %v849 = vunpack.c.h.b16 %v275
    %v850 = vunpack.c.l.b16 %v276
    %v851 = vunpack.c.h.b16 %v276
    %v852 = vunpack.c.l.b16 %v277
    %v853 = vunpack.c.h.b16 %v277
    %v854 = vunpack.c.l.b16 %v278
    %v855 = vunpack.c.h.b16 %v278
    %v856 = vunpack.c.l.b16 %v279
    %v857 = vunpack.c.h.b16 %v279
    %v858 = vunpack.c.l.b16 %v280
    %v859 = vunpack.c.h.b16 %v280
    %v860 = vunpack.c.l.b16 %v281
    %v861 = vunpack.c.h.b16 %v281
    %v862 = vunpack.c.l.b16 %v282
    %v863 = vunpack.c.h.b16 %v282
    %v864 = vunpack.c.l.b16 %v283
    %v865 = vunpack.c.h.b16 %v283
    %v866 = vunpack.c.l.b16 %v284
    %v867 = vunpack.c.h.b16 %v284
    %v868 = vunpack.c.l.b16 %v285
    %v869 = vunpack.c.h.b16 %v285
    %v870 = vunpack.c.l.b16 %v286
    %v871 = vunpack.c.h.b16 %v286
    %v872 = vunpack.c.l.b16 %v287
    %v873 = vunpack.c.h.b16 %v287
    %v874 = vunpack.c.l.b16 %v288
    %v875 = vunpack.c.h.b16 %v288
    %v876 = vunpack.c.l.b16 %v289
    %v877 = vunpack.c.h.b16 %v289
    %v878 = vunpack.c.l.b16 %v290
    %v879 = vunpack.c.h.b16 %v290
    %v880 = vunpack.c.l.b16 %v291
    %v881 = vunpack.c.h.b16 %v291
    %v882 = vunpack.c.l.b16 %v292
    %v883 = vunpack.c.h.b16 %v292
    %v884 = vunpack.c.l.b16 %v293
    %v885 = vunpack.c.h.b16 %v293
    %v886 = vunpack.c.l.b16 %v294
    %v887 = vunpack.c.h.b16 %v294
    %v888 = vunpack.c.l.b16 %v295
    %v889 = vunpack.c.h.b16 %v295
    %v890 = vunpack.c.l.b16 %v296
    %v891 = vunpack.c.h.b16 %v296
    %v892 = vunpack.c.l.b16 %v297
    %v893 = vunpack.c.h.b16 %v297
    %v894 = vunpack.c.l.b16 %v298
    %v895 = vunpack.c.h.b16 %v298
    %v896 = vunpack.c.l.b16 %v299
    %v897 = vunpack.c.h.b16 %v299
    %v898 = vunpack.c.l.b16 %v300
    %v899 = vunpack.c.h.b16 %v300
    %v900 = vunpack.c.l.b16 %v301
    %v901 = vunpack.c.h.b16 %v301
    %v902 = vunpack.c.l.b16 %v302
    %v903 = vunpack.c.h.b16 %v302
    %v904 = vunpack.c.l.b16 %v303
    %v905 = vunpack.c.h.b16 %v303
    %v906 = vunpack.c.l.b16 %v304
    %v907 = vunpack.c.h.b16 %v304
    %v908 = vunpack.c.l.b16 %v305
    %v909 = vunpack.c.h.b16 %v305
    %v910 = vunpack.c.l.b16 %v306
    %v911 = vunpack.c.h.b16 %v306
    %v912 = vunpack.c.l.b16 %v307
    %v913 = vunpack.c.h.b16 %v307
    %v914 = vunpack.c.l.b16 %v308
    %v915 = vunpack.c.h.b16 %v308
    %v916 = vunpack.c.l.b16 %v309
    %v917 = vunpack.c.h.b16 %v309
    %v918 = vunpack.c.l.b16 %v310
    %v919 = vunpack.c.h.b16 %v310
    %v920 = vunpack.c.l.b16 %v311
    %v921 = vunpack.c.h.b16 %v311
    %v922 = vunpack.c.l.b16 %v312
    %v923 = vunpack.c.h.b16 %v312
    %v924 = vunpack.c.l.b16 %v313
    %v925 = vunpack.c.h.b16 %v313
    %v926 = vunpack.c.l.b16 %v314
    %v927 = vunpack.c.h.b16 %v314
    %v928 = vunpack.c.l.b16 %v315
    %v929 = vunpack.c.h.b16 %v315
    %v930 = vunpack.c.l.b16 %v316
    %v931 = vunpack.c.h.b16 %v316
    %v932 = vunpack.c.l.b16 %v317
    %v933 = vunpack.c.h.b16 %v317
    %v934 = vunpack.c.l.b16 %v318
    %v935 = vunpack.c.h.b16 %v318
    %v936 = vunpack.c.l.b16 %v319
    %v937 = vunpack.c.h.b16 %v319
    %v938 = vunpack.c.l.b16 %v320
    %v939 = vunpack.c.h.b16 %v320
    %v940 = vunpack.c.l.b16 %v321
    %v941 = vunpack.c.h.b16 %v321
    %v942 = vunpack.c.l.b16 %v322
    %v943 = vunpack.c.h.b16 %v322
    %v944 = vunpack.c.l.b16 %v323
    %v945 = vunpack.c.h.b16 %v323
    %v946 = vpack.c.b16 %v558, %v554
    %v947 = vpack.c.b16 %v559, %v555
    %v948 = vpack.c.b16 %v560, %v556
    %v949 = vpack.c.b16 %v561, %v557
    %v950 = vpack.c.b16 %v566, %v562
    %v951 = vpack.c.b16 %v567, %v563
    %v952 = vpack.c.b16 %v568, %v564
    %v953 = vpack.c.b16 %v569, %v565
    %v954 = vpack.c.b16 %v574, %v570
    %v955 = vpack.c.b16 %v575, %v571
    %v956 = vpack.c.b16 %v576, %v572
    %v957 = vpack.c.b16 %v577, %v573
    %v958 = vpack.c.b16 %v582, %v578
    %v959 = vpack.c.b16 %v583, %v579
    %v960 = vpack.c.b16 %v584, %v580
    %v961 = vpack.c.b16 %v585, %v581
    %v962 = vpack.c.b16 %v590, %v586
    %v963 = vpack.c.b16 %v591, %v587
    %v964 = vpack.c.b16 %v592, %v588
    %v965 = vpack.c.b16 %v593, %v589
    %v966 = vpack.c.b16 %v598, %v594
    %v967 = vpack.c.b16 %v599, %v595
    %v968 = vpack.c.b16 %v600, %v596
    %v969 = vpack.c.b16 %v601, %v597
    %v970 = vpack.c.b16 %v606, %v602
    %v971 = vpack.c.b16 %v607, %v603
    %v972 = vpack.c.b16 %v608, %v604
    %v973 = vpack.c.b16 %v609, %v605
    %v974 = vpack.c.b16 %v614, %v610
    %v975 = vpack.c.b16 %v615, %v611
    %v976 = vpack.c.b16 %v616, %v612
    %v977 = vpack.c.b16 %v617, %v613
    %v978 = vpack.c.b16 %v622, %v618
    %v979 = vpack.c.b16 %v623, %v619
    %v980 = vpack.c.b16 %v624, %v620
    %v981 = vpack.c.b16 %v625, %v621
    %v982 = vpack.c.b16 %v630, %v626
    %v983 = vpack.c.b16 %v631, %v627
    %v984 = vpack.c.b16 %v632, %v628
    %v985 = vpack.c.b16 %v633, %v629
    %v986 = vpack.c.b16 %v638, %v634
    %v987 = vpack.c.b16 %v639, %v635
    %v988 = vpack.c.b16 %v640, %v636
    %v989 = vpack.c.b16 %v641, %v637
    %v990 = vpack.c.b16 %v646, %v642
    %v991 = vpack.c.b16 %v647, %v643
    %v992 = vpack.c.b16 %v648, %v644
    %v993 = vpack.c.b16 %v649, %v645
    %v994 = vpack.c.b16 %v654, %v650
    %v995 = vpack.c.b16 %v655, %v651
    %v996 = vpack.c.b16 %v656, %v652
    %v997 = vpack.c.b16 %v657, %v653
    %v998 = vpack.c.b16 %v662, %v658
    %v999 = vpack.c.b16 %v663, %v659
    %v1000 = vpack.c.b16 %v664, %v660
    %v1001 = vpack.c.b16 %v665, %v661
    %v1002 = vpack.c.b16 %v670, %v666
    %v1003 = vpack.c.b16 %v671, %v667
    %v1004 = vpack.c.b16 %v672, %v668
    %v1005 = vpack.c.b16 %v673, %v669
    %v1006 = vpack.c.b16 %v678, %v674
    %v1007 = vpack.c.b16 %v679, %v675
    %v1008 = vpack.c.b16 %v680, %v676
    %v1009 = vpack.c.b16 %v681, %v677
    %v1010 = vpack.c.b16 %v686, %v682
    %v1011 = vpack.c.b16 %v687, %v683
    %v1012 = vpack.c.b16 %v688, %v684
    %v1013 = vpack.c.b16 %v689, %v685
    %v1014 = vpack.c.b16 %v694, %v690
    %v1015 = vpack.c.b16 %v695, %v691
    %v1016 = vpack.c.b16 %v696, %v692
    %v1017 = vpack.c.b16 %v697, %v693
    %v1018 = vpack.c.b16 %v702, %v698
    %v1019 = vpack.c.b16 %v703, %v699
    %v1020 = vpack.c.b16 %v704, %v700
    %v1021 = vpack.c.b16 %v705, %v701
    %v1022 = vpack.c.b16 %v710, %v706
    %v1023 = vpack.c.b16 %v711, %v707
    %v1024 = vpack.c.b16 %v712, %v708
    %v1025 = vpack.c.b16 %v713, %v709
    %v1026 = vpack.c.b16 %v718, %v714
    %v1027 = vpack.c.b16 %v719, %v715
    %v1028 = vpack.c.b16 %v720, %v716
    %v1029 = vpack.c.b16 %v721, %v717
    %v1030 = vpack.c.b16 %v726, %v722
    %v1031 = vpack.c.b16 %v727, %v723
    %v1032 = vpack.c.b16 %v728, %v724
    %v1033 = vpack.c.b16 %v729, %v725
    %v1034 = vpack.c.b16 %v734, %v730
    %v1035 = vpack.c.b16 %v735, %v731
    %v1036 = vpack.c.b16 %v736, %v732
    %v1037 = vpack.c.b16 %v737, %v733
    %v1038 = vpack.c.b16 %v742, %v738
    %v1039 = vpack.c.b16 %v743, %v739
    %v1040 = vpack.c.b16 %v744, %v740
    %v1041 = vpack.c.b16 %v745, %v741
    %v1042 = vpack.c.b16 %v750, %v746
    %v1043 = vpack.c.b16 %v751, %v747
    %v1044 = vpack.c.b16 %v752, %v748
    %v1045 = vpack.c.b16 %v753, %v749
    %v1046 = vpack.c.b16 %v758, %v754
    %v1047 = vpack.c.b16 %v759, %v755
    %v1048 = vpack.c.b16 %v760, %v756
    %v1049 = vpack.c.b16 %v761, %v757
    %v1050 = vpack.c.b16 %v766, %v762
    %v1051 = vpack.c.b16 %v767, %v763
    %v1052 = vpack.c.b16 %v768, %v764
    %v1053 = vpack.c.b16 %v769, %v765
    %v1054 = vpack.c.b16 %v774, %v770
    %v1055 = vpack.c.b16 %v775, %v771
    %v1056 = vpack.c.b16 %v776, %v772
    %v1057 = vpack.c.b16 %v777, %v773
    %v1058 = vpack.c.b16 %v782, %v778
    %v1059 = vpack.c.b16 %v783, %v779
    %v1060 = vpack.c.b16 %v784, %v780
    %v1061 = vpack.c.b16 %v785, %v781
    %v1062 = vpack.c.b16 %v790, %v786
    %v1063 = vpack.c.b16 %v791, %v787
    %v1064 = vpack.c.b16 %v792, %v788
    %v1065 = vpack.c.b16 %v793, %v789
    %v1066 = vpack.c.b16 %v798, %v794
    %v1067 = vpack.c.b16 %v799, %v795
    %v1068 = vpack.c.b16 %v800, %v796
    %v1069 = vpack.c.b16 %v801, %v797
    %v1070 = vpack.c.b16 %v806, %v802
    %v1071 = vpack.c.b16 %v807, %v803
    %v1072 = vpack.c.b16 %v808, %v804
    %v1073 = vpack.c.b16 %v809, %v805
    %v1074 = vpack.c.b16 %v814, %v810
    %v1075 = vpack.c.b16 %v815, %v811
    %v1076 = vpack.c.b16 %v816, %v812
    %v1077 = vpack.c.b16 %v817, %v813
    %v1078 = vpack.c.b16 %v822, %v818
    %v1079 = vpack.c.b16 %v823, %v819
    %v1080 = vpack.c.b16 %v824, %v820
    %v1081 = vpack.c.b16 %v825, %v821
    %v1082 = vpack.c.b16 %v830, %v826
    %v1083 = vpack.c.b16 %v831, %v827
    %v1084 = vpack.c.b16 %v832, %v828
    %v1085 = vpack.c.b16 %v833, %v829
    %v1086 = vpack.c.b16 %v838, %v834
    %v1087 = vpack.c.b16 %v839, %v835
    %v1088 = vpack.c.b16 %v840, %v836
    %v1089 = vpack.c.b16 %v841, %v837
    %v1090 = vpack.c.b16 %v846, %v842
    %v1091 = vpack.c.b16 %v847, %v843
    %v1092 = vpack.c.b16 %v848, %v844
    %v1093 = vpack.c.b16 %v849, %v845
    %v1094 = vpack.c.b16 %v854, %v850
    %v1095 = vpack.c.b16 %v855, %v851
    %v1096 = vpack.c.b16 %v856, %v852
    %v1097 = vpack.c.b16 %v857, %v853
    %v1098 = vpack.c.b16 %v862, %v858
    %v1099 = vpack.c.b16 %v863, %v859
    %v1100 = vpack.c.b16 %v864, %v860
    %v1101 = vpack.c.b16 %v865, %v861
    %v1102 = vpack.c.b16 %v870, %v866
    %v1103 = vpack.c.b16 %v871, %v867
    %v1104 = vpack.c.b16 %v872, %v868
    %v1105 = vpack.c.b16 %v873, %v869
    %v1106 = vpack.c.b16 %v878, %v874
    %v1107 = vpack.c.b16 %v879, %v875
    %v1108 = vpack.c.b16 %v880, %v876
    %v1109 = vpack.c.b16 %v881, %v877
    %v1110 = vpack.c.b16 %v886, %v882
    %v1111 = vpack.c.b16 %v887, %v883
    %v1112 = vpack.c.b16 %v888, %v884
    %v1113 = vpack.c.b16 %v889, %v885
    %v1114 = vpack.c.b16 %v894, %v890
    %v1115 = vpack.c.b16 %v895, %v891
    %v1116 = vpack.c.b16 %v896, %v892
    %v1117 = vpack.c.b16 %v897, %v893
    %v1118 = vpack.c.b16 %v902, %v898
    %v1119 = vpack.c.b16 %v903, %v899
    %v1120 = vpack.c.b16 %v904, %v900
    %v1121 = vpack.c.b16 %v905, %v901
    %v1122 = vpack.c.b16 %v910, %v906
    %v1123 = vpack.c.b16 %v911, %v907
    %v1124 = vpack.c.b16 %v912, %v908
    %v1125 = vpack.c.b16 %v913, %v909
    %v1126 = vpack.c.b16 %v918, %v914
    %v1127 = vpack.c.b16 %v919, %v915
    %v1128 = vpack.c.b16 %v920, %v916
    %v1129 = vpack.c.b16 %v921, %v917
    %v1130 = vpack.c.b16 %v926, %v922
    %v1131 = vpack.c.b16 %v927, %v923
    %v1132 = vpack.c.b16 %v928, %v924
    %v1133 = vpack.c.b16 %v929, %v925
    %v1134 = vpack.c.b16 %v934, %v930
    %v1135 = vpack.c.b16 %v935, %v931
    %v1136 = vpack.c.b16 %v936, %v932
    %v1137 = vpack.c.b16 %v937, %v933
    %v1138 = vpack.c.b16 %v942, %v938
    %v1139 = vpack.c.b16 %v943, %v939
    %v1140 = vpack.c.b16 %v944, %v940
    %v1141 = vpack.c.b16 %v945, %v941
    %vm1338 = vcmask 130048
    %v1340 = vsel %vm1338, %v351, 0
    %1342 = vmatpush.bf16.msra.mxu0 %v974
    %1343 = vmatpush.bf16.msra.mxu0 %v970
    %1344 = vmatpush.bf16.msra.mxu0 %v966
    %1345 = vmatpush.bf16.msra.mxu0 %v962
    %1346 = vmatpush.bf16.msra.mxu0 %v958
    %1347 = vmatpush.bf16.msra.mxu0 %v954
    %1348 = vmatpush.bf16.msra.mxu0 %v950
    %1349 = vmatpush.bf16.msra.mxu0 %v946
    %1350 = vmatmul.bf16.gmra.mxu0 %v345
    %v1351 = vpop.f32.mrf.mxu0
    %v1352 = vadd.f32 %v326, %v1351
    %v1353 = vpop.f32.mrf.mxu0
    %1354 = vdwg.mxu0
    %1355 = vmatpush.bf16.msra.mxu0 %v1006
    %1356 = vmatpush.bf16.msra.mxu0 %v1002
    %1357 = vmatpush.bf16.msra.mxu0 %v998
    %1358 = vmatpush.bf16.msra.mxu0 %v994
    %1359 = vmatpush.bf16.msra.mxu0 %v990
    %1360 = vmatpush.bf16.msra.mxu0 %v986
    %1361 = vmatpush.bf16.msra.mxu0 %v982
    %1362 = vmatpush.bf16.msra.mxu0 %v978
    %1363 = vmatmul.bf16.gmra.mxu0 %v346
    %v1364 = vpop.f32.mrf.mxu0
    %v1365 = vadd.f32 %v1352, %v1364
    %v1366 = vpop.f32.mrf.mxu0
    %1367 = vdwg.mxu0
    %1368 = vmatpush.bf16.msra.mxu0 %v1038
    %1369 = vmatpush.bf16.msra.mxu0 %v1034
    %1370 = vmatpush.bf16.msra.mxu0 %v1030
    %1371 = vmatpush.bf16.msra.mxu0 %v1026
    %1372 = vmatpush.bf16.msra.mxu0 %v1022
    %1373 = vmatpush.bf16.msra.mxu0 %v1018
    %1374 = vmatpush.bf16.msra.mxu0 %v1014
    %1375 = vmatpush.bf16.msra.mxu0 %v1010
    %1376 = vmatmul.bf16.gmra.mxu0 %v347
    %v1377 = vpop.f32.mrf.mxu0
    %v1378 = vadd.f32 %v1365, %v1377
    %v1379 = vpop.f32.mrf.mxu0
    %1380 = vdwg.mxu0
    %1381 = vmatpush.bf16.msra.mxu0 %v1070
    %1382 = vmatpush.bf16.msra.mxu0 %v1066
    %1383 = vmatpush.bf16.msra.mxu0 %v1062
    %1384 = vmatpush.bf16.msra.mxu0 %v1058
    %1385 = vmatpush.bf16.msra.mxu0 %v1054
    %1386 = vmatpush.bf16.msra.mxu0 %v1050
    %1387 = vmatpush.bf16.msra.mxu0 %v1046
    %1388 = vmatpush.bf16.msra.mxu0 %v1042
    %1389 = vmatmul.bf16.gmra.mxu0 %v348
    %v1390 = vpop.f32.mrf.mxu0
    %v1391 = vadd.f32 %v1378, %v1390
    %v1392 = vpop.f32.mrf.mxu0
    %1393 = vdwg.mxu0
    %1394 = vmatpush.bf16.msra.mxu0 %v1102
    %1395 = vmatpush.bf16.msra.mxu0 %v1098
    %1396 = vmatpush.bf16.msra.mxu0 %v1094
    %1397 = vmatpush.bf16.msra.mxu0 %v1090
    %1398 = vmatpush.bf16.msra.mxu0 %v1086
    %1399 = vmatpush.bf16.msra.mxu0 %v1082
    %1400 = vmatpush.bf16.msra.mxu0 %v1078
    %1401 = vmatpush.bf16.msra.mxu0 %v1074
    %1402 = vmatmul.bf16.gmra.mxu0 %v349
    %v1403 = vpop.f32.mrf.mxu0
    %v1404 = vadd.f32 %v1391, %v1403
    %v1405 = vpop.f32.mrf.mxu0
    %1406 = vdwg.mxu0
    %1407 = vmatpush.bf16.msra.mxu0 %v1134
    %1408 = vmatpush.bf16.msra.mxu0 %v1130
    %1409 = vmatpush.bf16.msra.mxu0 %v1126
    %1410 = vmatpush.bf16.msra.mxu0 %v1122
    %1411 = vmatpush.bf16.msra.mxu0 %v1118
    %1412 = vmatpush.bf16.msra.mxu0 %v1114
    %1413 = vmatpush.bf16.msra.mxu0 %v1110
    %1414 = vmatpush.bf16.msra.mxu0 %v1106
    %1415 = vmatmul.bf16.gmra.mxu0 %v350
    %v1416 = vpop.f32.mrf.mxu0
    %v1417 = vadd.f32 %v1404, %v1416
    %v1418 = vpop.f32.mrf.mxu0
    %1419 = vdwg.mxu0
    %1420 = vmatpush.bf16.msra.mxu0 0
    %1421 = vmatpush.bf16.msra.mxu0 0
    %1422 = vmatpush.bf16.msra.mxu0 0
    %1423 = vmatpush.bf16.msra.mxu0 0
    %1424 = vmatpush.bf16.msra.mxu0 0
    %1425 = vmatpush.bf16.msra.mxu0 0
    %1426 = vmatpush.bf16.msra.mxu0 0
    %1427 = vmatpush.bf16.msra.mxu0 %v1138
    %1428 = vmatmul.bf16.gmra.mxu0 %v1340
    %v1429 = vpop.f32.mrf.mxu0
    %v1430 = vadd.f32 %v1417, %v1429
    %v1431 = vpop.f32.mrf.mxu0
    %1432 = vdwg.mxu0
    %1433 = vmatpush.bf16.msra.mxu0 %v975
    %1434 = vmatpush.bf16.msra.mxu0 %v971
    %1435 = vmatpush.bf16.msra.mxu0 %v967
    %1436 = vmatpush.bf16.msra.mxu0 %v963
    %1437 = vmatpush.bf16.msra.mxu0 %v959
    %1438 = vmatpush.bf16.msra.mxu0 %v955
    %1439 = vmatpush.bf16.msra.mxu0 %v951
    %1440 = vmatpush.bf16.msra.mxu0 %v947
    %1441 = vmatmul.bf16.gmra.mxu0 %v345
    %v1442 = vpop.f32.mrf.mxu0
    %v1443 = vadd.f32 %v327, %v1442
    %v1444 = vpop.f32.mrf.mxu0
    %1445 = vdwg.mxu0
    %1446 = vmatpush.bf16.msra.mxu0 %v1007
    %1447 = vmatpush.bf16.msra.mxu0 %v1003
    %1448 = vmatpush.bf16.msra.mxu0 %v999
    %1449 = vmatpush.bf16.msra.mxu0 %v995
    %1450 = vmatpush.bf16.msra.mxu0 %v991
    %1451 = vmatpush.bf16.msra.mxu0 %v987
    %1452 = vmatpush.bf16.msra.mxu0 %v983
    %1453 = vmatpush.bf16.msra.mxu0 %v979
    %1454 = vmatmul.bf16.gmra.mxu0 %v346
    %v1455 = vpop.f32.mrf.mxu0
    %v1456 = vadd.f32 %v1443, %v1455
    %v1457 = vpop.f32.mrf.mxu0
    %1458 = vdwg.mxu0
    %1459 = vmatpush.bf16.msra.mxu0 %v1039
    %1460 = vmatpush.bf16.msra.mxu0 %v1035
    %1461 = vmatpush.bf16.msra.mxu0 %v1031
    %1462 = vmatpush.bf16.msra.mxu0 %v1027
    %1463 = vmatpush.bf16.msra.mxu0 %v1023
    %1464 = vmatpush.bf16.msra.mxu0 %v1019
    %1465 = vmatpush.bf16.msra.mxu0 %v1015
    %1466 = vmatpush.bf16.msra.mxu0 %v1011
    %1467 = vmatmul.bf16.gmra.mxu0 %v347
    %v1468 = vpop.f32.mrf.mxu0
    %v1469 = vadd.f32 %v1456, %v1468
    %v1470 = vpop.f32.mrf.mxu0
    %1471 = vdwg.mxu0
    %1472 = vmatpush.bf16.msra.mxu0 %v1071
    %1473 = vmatpush.bf16.msra.mxu0 %v1067
    %1474 = vmatpush.bf16.msra.mxu0 %v1063
    %1475 = vmatpush.bf16.msra.mxu0 %v1059
    %1476 = vmatpush.bf16.msra.mxu0 %v1055
    %1477 = vmatpush.bf16.msra.mxu0 %v1051
    %1478 = vmatpush.bf16.msra.mxu0 %v1047
    %1479 = vmatpush.bf16.msra.mxu0 %v1043
    %1480 = vmatmul.bf16.gmra.mxu0 %v348
    %v1481 = vpop.f32.mrf.mxu0
    %v1482 = vadd.f32 %v1469, %v1481
    %v1483 = vpop.f32.mrf.mxu0
    %1484 = vdwg.mxu0
    %1485 = vmatpush.bf16.msra.mxu0 %v1103
    %1486 = vmatpush.bf16.msra.mxu0 %v1099
    %1487 = vmatpush.bf16.msra.mxu0 %v1095
    %1488 = vmatpush.bf16.msra.mxu0 %v1091
    %1489 = vmatpush.bf16.msra.mxu0 %v1087
    %1490 = vmatpush.bf16.msra.mxu0 %v1083
    %1491 = vmatpush.bf16.msra.mxu0 %v1079
    %1492 = vmatpush.bf16.msra.mxu0 %v1075
    %1493 = vmatmul.bf16.gmra.mxu0 %v349
    %v1494 = vpop.f32.mrf.mxu0
    %v1495 = vadd.f32 %v1482, %v1494
    %v1496 = vpop.f32.mrf.mxu0
    %1497 = vdwg.mxu0
    %1498 = vmatpush.bf16.msra.mxu0 %v1135
    %1499 = vmatpush.bf16.msra.mxu0 %v1131
    %1500 = vmatpush.bf16.msra.mxu0 %v1127
    %1501 = vmatpush.bf16.msra.mxu0 %v1123
    %1502 = vmatpush.bf16.msra.mxu0 %v1119
    %1503 = vmatpush.bf16.msra.mxu0 %v1115
    %1504 = vmatpush.bf16.msra.mxu0 %v1111
    %1505 = vmatpush.bf16.msra.mxu0 %v1107
    %1506 = vmatmul.bf16.gmra.mxu0 %v350
    %v1507 = vpop.f32.mrf.mxu0
    %v1508 = vadd.f32 %v1495, %v1507
    %v1509 = vpop.f32.mrf.mxu0
    %1510 = vdwg.mxu0
    %1511 = vmatpush.bf16.msra.mxu0 0
    %1512 = vmatpush.bf16.msra.mxu0 0
    %1513 = vmatpush.bf16.msra.mxu0 0
    %1514 = vmatpush.bf16.msra.mxu0 0
    %1515 = vmatpush.bf16.msra.mxu0 0
    %1516 = vmatpush.bf16.msra.mxu0 0
    %1517 = vmatpush.bf16.msra.mxu0 0
    %1518 = vmatpush.bf16.msra.mxu0 %v1139
    %1519 = vmatmul.bf16.gmra.mxu0 %v1340
    %v1520 = vpop.f32.mrf.mxu0
    %v1521 = vadd.f32 %v1508, %v1520
    %v1522 = vpop.f32.mrf.mxu0
    %1523 = vdwg.mxu0
    %1524 = vmatpush.bf16.msra.mxu0 %v976
    %1525 = vmatpush.bf16.msra.mxu0 %v972
    %1526 = vmatpush.bf16.msra.mxu0 %v968
    %1527 = vmatpush.bf16.msra.mxu0 %v964
    %1528 = vmatpush.bf16.msra.mxu0 %v960
    %1529 = vmatpush.bf16.msra.mxu0 %v956
    %1530 = vmatpush.bf16.msra.mxu0 %v952
    %1531 = vmatpush.bf16.msra.mxu0 %v948
    %1532 = vmatmul.bf16.gmra.mxu0 %v345
    %v1533 = vpop.f32.mrf.mxu0
    %v1534 = vadd.f32 %v328, %v1533
    %v1535 = vpop.f32.mrf.mxu0
    %1536 = vdwg.mxu0
    %1537 = vmatpush.bf16.msra.mxu0 %v1008
    %1538 = vmatpush.bf16.msra.mxu0 %v1004
    %1539 = vmatpush.bf16.msra.mxu0 %v1000
    %1540 = vmatpush.bf16.msra.mxu0 %v996
    %1541 = vmatpush.bf16.msra.mxu0 %v992
    %1542 = vmatpush.bf16.msra.mxu0 %v988
    %1543 = vmatpush.bf16.msra.mxu0 %v984
    %1544 = vmatpush.bf16.msra.mxu0 %v980
    %1545 = vmatmul.bf16.gmra.mxu0 %v346
    %v1546 = vpop.f32.mrf.mxu0
    %v1547 = vadd.f32 %v1534, %v1546
    %v1548 = vpop.f32.mrf.mxu0
    %1549 = vdwg.mxu0
    %1550 = vmatpush.bf16.msra.mxu0 %v1040
    %1551 = vmatpush.bf16.msra.mxu0 %v1036
    %1552 = vmatpush.bf16.msra.mxu0 %v1032
    %1553 = vmatpush.bf16.msra.mxu0 %v1028
    %1554 = vmatpush.bf16.msra.mxu0 %v1024
    %1555 = vmatpush.bf16.msra.mxu0 %v1020
    %1556 = vmatpush.bf16.msra.mxu0 %v1016
    %1557 = vmatpush.bf16.msra.mxu0 %v1012
    %1558 = vmatmul.bf16.gmra.mxu0 %v347
    %v1559 = vpop.f32.mrf.mxu0
    %v1560 = vadd.f32 %v1547, %v1559
    %v1561 = vpop.f32.mrf.mxu0
    %1562 = vdwg.mxu0
    %1563 = vmatpush.bf16.msra.mxu0 %v1072
    %1564 = vmatpush.bf16.msra.mxu0 %v1068
    %1565 = vmatpush.bf16.msra.mxu0 %v1064
    %1566 = vmatpush.bf16.msra.mxu0 %v1060
    %1567 = vmatpush.bf16.msra.mxu0 %v1056
    %1568 = vmatpush.bf16.msra.mxu0 %v1052
    %1569 = vmatpush.bf16.msra.mxu0 %v1048
    %1570 = vmatpush.bf16.msra.mxu0 %v1044
    %1571 = vmatmul.bf16.gmra.mxu0 %v348
    %v1572 = vpop.f32.mrf.mxu0
    %v1573 = vadd.f32 %v1560, %v1572
    %v1574 = vpop.f32.mrf.mxu0
    %1575 = vdwg.mxu0
    %1576 = vmatpush.bf16.msra.mxu0 %v1104
    %1577 = vmatpush.bf16.msra.mxu0 %v1100
    %1578 = vmatpush.bf16.msra.mxu0 %v1096
    %1579 = vmatpush.bf16.msra.mxu0 %v1092
    %1580 = vmatpush.bf16.msra.mxu0 %v1088
    %1581 = vmatpush.bf16.msra.mxu0 %v1084
    %1582 = vmatpush.bf16.msra.mxu0 %v1080
    %1583 = vmatpush.bf16.msra.mxu0 %v1076
    %1584 = vmatmul.bf16.gmra.mxu0 %v349
    %v1585 = vpop.f32.mrf.mxu0
    %v1586 = vadd.f32 %v1573, %v1585
    %v1587 = vpop.f32.mrf.mxu0
    %1588 = vdwg.mxu0
    %1589 = vmatpush.bf16.msra.mxu0 %v1136
    %1590 = vmatpush.bf16.msra.mxu0 %v1132
    %1591 = vmatpush.bf16.msra.mxu0 %v1128
    %1592 = vmatpush.bf16.msra.mxu0 %v1124
    %1593 = vmatpush.bf16.msra.mxu0 %v1120
    %1594 = vmatpush.bf16.msra.mxu0 %v1116
    %1595 = vmatpush.bf16.msra.mxu0 %v1112
    %1596 = vmatpush.bf16.msra.mxu0 %v1108
    %1597 = vmatmul.bf16.gmra.mxu0 %v350
    %v1598 = vpop.f32.mrf.mxu0
    %v1599 = vadd.f32 %v1586, %v1598
    %v1600 = vpop.f32.mrf.mxu0
    %1601 = vdwg.mxu0
    %1602 = vmatpush.bf16.msra.mxu0 0
    %1603 = vmatpush.bf16.msra.mxu0 0
    %1604 = vmatpush.bf16.msra.mxu0 0
    %1605 = vmatpush.bf16.msra.mxu0 0
    %1606 = vmatpush.bf16.msra.mxu0 0
    %1607 = vmatpush.bf16.msra.mxu0 0
    %1608 = vmatpush.bf16.msra.mxu0 0
    %1609 = vmatpush.bf16.msra.mxu0 %v1140
    %1610 = vmatmul.bf16.gmra.mxu0 %v1340
    %v1611 = vpop.f32.mrf.mxu0
    %v1612 = vadd.f32 %v1599, %v1611
    %v1613 = vpop.f32.mrf.mxu0
    %1614 = vdwg.mxu0
    %1615 = vmatpush.bf16.msra.mxu0 %v977
    %1616 = vmatpush.bf16.msra.mxu0 %v973
    %1617 = vmatpush.bf16.msra.mxu0 %v969
    %1618 = vmatpush.bf16.msra.mxu0 %v965
    %1619 = vmatpush.bf16.msra.mxu0 %v961
    %1620 = vmatpush.bf16.msra.mxu0 %v957
    %1621 = vmatpush.bf16.msra.mxu0 %v953
    %1622 = vmatpush.bf16.msra.mxu0 %v949
    %1623 = vmatmul.bf16.gmra.mxu0 %v345
    %v1624 = vpop.f32.mrf.mxu0
    %v1625 = vadd.f32 %v329, %v1624
    %v1626 = vpop.f32.mrf.mxu0
    %1627 = vdwg.mxu0
    %1628 = vmatpush.bf16.msra.mxu0 %v1009
    %1629 = vmatpush.bf16.msra.mxu0 %v1005
    %1630 = vmatpush.bf16.msra.mxu0 %v1001
    %1631 = vmatpush.bf16.msra.mxu0 %v997
    %1632 = vmatpush.bf16.msra.mxu0 %v993
    %1633 = vmatpush.bf16.msra.mxu0 %v989
    %1634 = vmatpush.bf16.msra.mxu0 %v985
    %1635 = vmatpush.bf16.msra.mxu0 %v981
    %1636 = vmatmul.bf16.gmra.mxu0 %v346
    %v1637 = vpop.f32.mrf.mxu0
    %v1638 = vadd.f32 %v1625, %v1637
    %v1639 = vpop.f32.mrf.mxu0
    %1640 = vdwg.mxu0
    %1641 = vmatpush.bf16.msra.mxu0 %v1041
    %1642 = vmatpush.bf16.msra.mxu0 %v1037
    %1643 = vmatpush.bf16.msra.mxu0 %v1033
    %1644 = vmatpush.bf16.msra.mxu0 %v1029
    %1645 = vmatpush.bf16.msra.mxu0 %v1025
    %1646 = vmatpush.bf16.msra.mxu0 %v1021
    %1647 = vmatpush.bf16.msra.mxu0 %v1017
    %1648 = vmatpush.bf16.msra.mxu0 %v1013
    %1649 = vmatmul.bf16.gmra.mxu0 %v347
    %v1650 = vpop.f32.mrf.mxu0
    %v1651 = vadd.f32 %v1638, %v1650
    %v1652 = vpop.f32.mrf.mxu0
    %1653 = vdwg.mxu0
    %1654 = vmatpush.bf16.msra.mxu0 %v1073
    %1655 = vmatpush.bf16.msra.mxu0 %v1069
    %1656 = vmatpush.bf16.msra.mxu0 %v1065
    %1657 = vmatpush.bf16.msra.mxu0 %v1061
    %1658 = vmatpush.bf16.msra.mxu0 %v1057
    %1659 = vmatpush.bf16.msra.mxu0 %v1053
    %1660 = vmatpush.bf16.msra.mxu0 %v1049
    %1661 = vmatpush.bf16.msra.mxu0 %v1045
    %1662 = vmatmul.bf16.gmra.mxu0 %v348
    %v1663 = vpop.f32.mrf.mxu0
    %v1664 = vadd.f32 %v1651, %v1663
    %v1665 = vpop.f32.mrf.mxu0
    %1666 = vdwg.mxu0
    %1667 = vmatpush.bf16.msra.mxu0 %v1105
    %1668 = vmatpush.bf16.msra.mxu0 %v1101
    %1669 = vmatpush.bf16.msra.mxu0 %v1097
    %1670 = vmatpush.bf16.msra.mxu0 %v1093
    %1671 = vmatpush.bf16.msra.mxu0 %v1089
    %1672 = vmatpush.bf16.msra.mxu0 %v1085
    %1673 = vmatpush.bf16.msra.mxu0 %v1081
    %1674 = vmatpush.bf16.msra.mxu0 %v1077
    %1675 = vmatmul.bf16.gmra.mxu0 %v349
    %v1676 = vpop.f32.mrf.mxu0
    %v1677 = vadd.f32 %v1664, %v1676
    %v1678 = vpop.f32.mrf.mxu0
    %1679 = vdwg.mxu0
    %1680 = vmatpush.bf16.msra.mxu0 %v1137
    %1681 = vmatpush.bf16.msra.mxu0 %v1133
    %1682 = vmatpush.bf16.msra.mxu0 %v1129
    %1683 = vmatpush.bf16.msra.mxu0 %v1125
    %1684 = vmatpush.bf16.msra.mxu0 %v1121
    %1685 = vmatpush.bf16.msra.mxu0 %v1117
    %1686 = vmatpush.bf16.msra.mxu0 %v1113
    %1687 = vmatpush.bf16.msra.mxu0 %v1109
    %1688 = vmatmul.bf16.gmra.mxu0 %v350
    %v1689 = vpop.f32.mrf.mxu0
    %v1690 = vadd.f32 %v1677, %v1689
    %v1691 = vpop.f32.mrf.mxu0
    %1692 = vdwg.mxu0
    %1693 = vmatpush.bf16.msra.mxu0 0
    %1694 = vmatpush.bf16.msra.mxu0 0
    %1695 = vmatpush.bf16.msra.mxu0 0
    %1696 = vmatpush.bf16.msra.mxu0 0
    %1697 = vmatpush.bf16.msra.mxu0 0
    %1698 = vmatpush.bf16.msra.mxu0 0
    %1699 = vmatpush.bf16.msra.mxu0 0
    %1700 = vmatpush.bf16.msra.mxu0 %v1141
    %1701 = vmatmul.bf16.gmra.mxu0 %v1340
    %v1702 = vpop.f32.mrf.mxu0
    %v1703 = vadd.f32 %v1690, %v1702
    %v1704 = vpop.f32.mrf.mxu0
    %1705 = vdwg.mxu0
    %v1706 = vmax.f32 %v1430, 0.0
    %v1707 = vmax.f32 %v1521, 0.0
    %v1708 = vmax.f32 %v1612, 0.0
    %v1709 = vmax.f32 %v1703, 0.0
    %v1710 = vand.u32 2147483647, %v1430
    %v1711 = vand.u32 2147483647, %v1521
    %v1712 = vand.u32 2147483647, %v1612
    %v1713 = vand.u32 2147483647, %v1703
    %v1714 = vsub.f32 0.0, %v1710
    %v1715 = vsub.f32 0.0, %v1711
    %v1716 = vsub.f32 0.0, %v1712
    %v1717 = vsub.f32 0.0, %v1713
    %v1718 = vmul.f32 %v1714, 1.442695
    %v1719 = vpow.pop %v1718
    %v1720 = vmul.f32 %v1715, 1.442695
    %v1721 = vpow.pop %v1720
    %v1722 = vmul.f32 %v1716, 1.442695
    %v1723 = vpow.pop %v1722
    %v1724 = vmul.f32 %v1717, 1.442695
    %v1725 = vpow.pop %v1724
    %v1726 = vadd.f32 %v1719, 1.0
    %v1727 = vlog2.pop %v1726
    %v1728 = vmul.f32 %v1727, 0.6931472
    %v1729 = vmul.f32 -0.5, %v1719
    %v1730 = vadd.f32 %v1729, 1.0
    %v1731 = vmul.f32 %v1730, %v1719
    %v1732 = vand.u32 2147483647, %v1719
    %vm1733 = vcmp.lt.f32.partialorder %v1732, 0.0004427343
    %v1734 = vsel %vm1733, %v1731, %v1728
    %v1735 = vadd.f32 %v1721, 1.0
    %v1736 = vlog2.pop %v1735
    %v1737 = vmul.f32 %v1736, 0.6931472
    %v1738 = vmul.f32 -0.5, %v1721
    %v1739 = vadd.f32 %v1738, 1.0
    %v1740 = vmul.f32 %v1739, %v1721
    %v1741 = vand.u32 2147483647, %v1721
    %vm1742 = vcmp.lt.f32.partialorder %v1741, 0.0004427343
    %v1743 = vsel %vm1742, %v1740, %v1737
    %v1744 = vadd.f32 %v1723, 1.0
    %v1745 = vlog2.pop %v1744
    %v1746 = vmul.f32 %v1745, 0.6931472
    %v1747 = vmul.f32 -0.5, %v1723
    %v1748 = vadd.f32 %v1747, 1.0
    %v1749 = vmul.f32 %v1748, %v1723
    %v1750 = vand.u32 2147483647, %v1723
    %vm1751 = vcmp.lt.f32.partialorder %v1750, 0.0004427343
    %v1752 = vsel %vm1751, %v1749, %v1746
    %v1753 = vadd.f32 %v1725, 1.0
    %v1754 = vlog2.pop %v1753
    %v1755 = vmul.f32 %v1754, 0.6931472
    %v1756 = vmul.f32 -0.5, %v1725
    %v1757 = vadd.f32 %v1756, 1.0
    %v1758 = vmul.f32 %v1757, %v1725
    %v1759 = vand.u32 2147483647, %v1725
    %vm1760 = vcmp.lt.f32.partialorder %v1759, 0.0004427343
    %v1761 = vsel %vm1760, %v1758, %v1755
    %v1762 = vadd.f32 %v1706, %v1734
    %v1763 = vadd.f32 %v1707, %v1743
    %v1764 = vadd.f32 %v1708, %v1752
    %v1765 = vadd.f32 %v1709, %v1761
    %v1766 = vpack.c.bf16 %v1762, %v1762
    %v1767 = vpack.c.bf16 %v1763, %v1763
    %v1768 = vpack.c.bf16 %v1764, %v1764
    %v1769 = vpack.c.bf16 %v1765, %v1765
    %v1770 = vld [vmem:[#allocation8] sm:$0xff]
    %v1771 = vld [vmem:[#allocation8 + $0x8] sm:$0xff]
    %v1772 = vld [vmem:[#allocation8 + $0x10] sm:$0xff]
    %v1773 = vld [vmem:[#allocation8 + $0x18] sm:$0xff]
    %v1774 = vld [vmem:[#allocation8 + $0x20] sm:$0xff]
    %v1775 = vld [vmem:[#allocation8 + $0x28] sm:$0xff]
    %v1776 = vld [vmem:[#allocation8 + $0x30] sm:$0xff]
    %v1777 = vld [vmem:[#allocation8 + $0x38] sm:$0xff]
    %v1778 = vld [vmem:[#allocation8 + $0x40] sm:$0xff]
    %v1779 = vld [vmem:[#allocation8 + $0x48] sm:$0xff]
    %v1780 = vld [vmem:[#allocation8 + $0x50] sm:$0xff]
    %v1781 = vld [vmem:[#allocation8 + $0x58] sm:$0xff]
    %v1782 = vld [vmem:[#allocation8 + $0x60] sm:$0xff]
    %v1783 = vld [vmem:[#allocation8 + $0x68] sm:$0xff]
    %v1784 = vld [vmem:[#allocation8 + $0x70] sm:$0xff]
    %v1785 = vld [vmem:[#allocation8 + $0x78] sm:$0xff]
    %v1786 = vld [vmem:[#allocation8 + $0x80] sm:$0xff]
    %v1787 = vld [vmem:[#allocation8 + $0x88] sm:$0xff]
    %v1788 = vld [vmem:[#allocation8 + $0x90] sm:$0xff]
    %v1789 = vld [vmem:[#allocation8 + $0x98] sm:$0xff]
    %v1790 = vld [vmem:[#allocation8 + $0xa0] sm:$0xff]
    %v1791 = vld [vmem:[#allocation8 + $0xa8] sm:$0xff]
    %v1792 = vld [vmem:[#allocation8 + $0xb0] sm:$0xff]
    %v1793 = vld [vmem:[#allocation8 + $0xb8] sm:$0xff]
    %v1794 = vld [vmem:[#allocation8 + $0xc0] sm:$0xff]
    %v1795 = vld [vmem:[#allocation8 + $0xc8] sm:$0xff]
    %v1796 = vld [vmem:[#allocation8 + $0xd0] sm:$0xff]
    %v1797 = vld [vmem:[#allocation8 + $0xd8] sm:$0xff]
    %v1798 = vld [vmem:[#allocation8 + $0xe0] sm:$0xff]
    %v1799 = vld [vmem:[#allocation8 + $0xe8] sm:$0xff]
    %v1800 = vld [vmem:[#allocation8 + $0xf0] sm:$0xff]
    %v1801 = vld [vmem:[#allocation8 + $0xf8] sm:$0xff]
    %v1802 = vld [vmem:[#allocation8 + $0x100] sm:$0xff]
    %v1803 = vld [vmem:[#allocation8 + $0x108] sm:$0xff]
    %v1804 = vld [vmem:[#allocation8 + $0x110] sm:$0xff]
    %v1805 = vld [vmem:[#allocation8 + $0x118] sm:$0xff]
    %v1806 = vld [vmem:[#allocation8 + $0x120] sm:$0xff]
    %v1807 = vld [vmem:[#allocation8 + $0x128] sm:$0xff]
    %v1808 = vld [vmem:[#allocation8 + $0x130] sm:$0xff]
    %v1809 = vld [vmem:[#allocation8 + $0x138] sm:$0xff]
    %v1810 = vld [vmem:[#allocation8 + $0x140] sm:$0xff]
    %v1811 = vld [vmem:[#allocation8 + $0x148] sm:$0xff]
    %v1812 = vld [vmem:[#allocation8 + $0x150] sm:$0xff]
    %v1813 = vld [vmem:[#allocation8 + $0x158] sm:$0xff]
    %v1814 = vld [vmem:[#allocation8 + $0x160] sm:$0xff]
    %v1815 = vld [vmem:[#allocation8 + $0x168] sm:$0xff]
    %v1816 = vld [vmem:[#allocation8 + $0x170] sm:$0xff]
    %v1817 = vld [vmem:[#allocation8 + $0x178] sm:$0xff]
    %v1818 = vld [vmem:[#allocation8 + $0x180] sm:$0xff]
    %v1819 = vld [vmem:[#allocation8 + $0x188] sm:$0xff]
    %v1820 = vld [vmem:[#allocation8 + $0x190] sm:$0xff]
    %v1821 = vld [vmem:[#allocation8 + $0x198] sm:$0xff]
    %v1822 = vld [vmem:[#allocation8 + $0x1a0] sm:$0xff]
    %v1823 = vld [vmem:[#allocation8 + $0x1a8] sm:$0xff]
    %v1824 = vld [vmem:[#allocation8 + $0x1b0] sm:$0xff]
    %v1825 = vld [vmem:[#allocation8 + $0x1b8] sm:$0xff]
    %v1826 = vld [vmem:[#allocation8 + $0x1c0] sm:$0xff]
    %v1827 = vld [vmem:[#allocation8 + $0x1c8] sm:$0xff]
    %v1828 = vld [vmem:[#allocation8 + $0x1d0] sm:$0xff]
    %v1829 = vld [vmem:[#allocation8 + $0x1d8] sm:$0xff]
    %v1830 = vld [vmem:[#allocation8 + $0x1e0] sm:$0xff]
    %v1831 = vld [vmem:[#allocation8 + $0x1e8] sm:$0xff]
    %v1832 = vld [vmem:[#allocation8 + $0x1f0] sm:$0xff]
    %v1833 = vld [vmem:[#allocation8 + $0x1f8] sm:$0xff]
    %v1834 = vld [vmem:[%s4] sm:$0x3]
    %v1836 = vperm.slane %v1834, 0
    %v1837 = vperm.slane %v1834, 1
    %v1904 = vunpack.c.l.b16 %v1770
    %v1905 = vunpack.c.h.b16 %v1770
    %v1906 = vunpack.c.l.b16 %v1771
    %v1907 = vunpack.c.h.b16 %v1771
    %v1908 = vunpack.c.l.b16 %v1772
    %v1909 = vunpack.c.h.b16 %v1772
    %v1910 = vunpack.c.l.b16 %v1773
    %v1911 = vunpack.c.h.b16 %v1773
    %v1912 = vunpack.c.l.b16 %v1774
    %v1913 = vunpack.c.h.b16 %v1774
    %v1914 = vunpack.c.l.b16 %v1775
    %v1915 = vunpack.c.h.b16 %v1775
    %v1916 = vunpack.c.l.b16 %v1776
    %v1917 = vunpack.c.h.b16 %v1776
    %v1918 = vunpack.c.l.b16 %v1777
    %v1919 = vunpack.c.h.b16 %v1777
    %v1920 = vunpack.c.l.b16 %v1778
    %v1921 = vunpack.c.h.b16 %v1778
    %v1922 = vunpack.c.l.b16 %v1779
    %v1923 = vunpack.c.h.b16 %v1779
    %v1924 = vunpack.c.l.b16 %v1780
    %v1925 = vunpack.c.h.b16 %v1780
    %v1926 = vunpack.c.l.b16 %v1781
    %v1927 = vunpack.c.h.b16 %v1781
    %v1928 = vunpack.c.l.b16 %v1782
    %v1929 = vunpack.c.h.b16 %v1782
    %v1930 = vunpack.c.l.b16 %v1783
    %v1931 = vunpack.c.h.b16 %v1783
    %v1932 = vunpack.c.l.b16 %v1784
    %v1933 = vunpack.c.h.b16 %v1784
    %v1934 = vunpack.c.l.b16 %v1785
    %v1935 = vunpack.c.h.b16 %v1785
    %v1936 = vunpack.c.l.b16 %v1786
    %v1937 = vunpack.c.h.b16 %v1786
    %v1938 = vunpack.c.l.b16 %v1787
    %v1939 = vunpack.c.h.b16 %v1787
    %v1940 = vunpack.c.l.b16 %v1788
    %v1941 = vunpack.c.h.b16 %v1788
    %v1942 = vunpack.c.l.b16 %v1789
    %v1943 = vunpack.c.h.b16 %v1789
    %v1944 = vunpack.c.l.b16 %v1790
    %v1945 = vunpack.c.h.b16 %v1790
    %v1946 = vunpack.c.l.b16 %v1791
    %v1947 = vunpack.c.h.b16 %v1791
    %v1948 = vunpack.c.l.b16 %v1792
    %v1949 = vunpack.c.h.b16 %v1792
    %v1950 = vunpack.c.l.b16 %v1793
    %v1951 = vunpack.c.h.b16 %v1793
    %v1952 = vunpack.c.l.b16 %v1794
    %v1953 = vunpack.c.h.b16 %v1794
    %v1954 = vunpack.c.l.b16 %v1795
    %v1955 = vunpack.c.h.b16 %v1795
    %v1956 = vunpack.c.l.b16 %v1796
    %v1957 = vunpack.c.h.b16 %v1796
    %v1958 = vunpack.c.l.b16 %v1797
    %v1959 = vunpack.c.h.b16 %v1797
    %v1960 = vunpack.c.l.b16 %v1798
    %v1961 = vunpack.c.h.b16 %v1798
    %v1962 = vunpack.c.l.b16 %v1799
    %v1963 = vunpack.c.h.b16 %v1799
    %v1964 = vunpack.c.l.b16 %v1800
    %v1965 = vunpack.c.h.b16 %v1800
    %v1966 = vunpack.c.l.b16 %v1801
    %v1967 = vunpack.c.h.b16 %v1801
    %v1968 = vunpack.c.l.b16 %v1802
    %v1969 = vunpack.c.h.b16 %v1802
    %v1970 = vunpack.c.l.b16 %v1803
    %v1971 = vunpack.c.h.b16 %v1803
    %v1972 = vunpack.c.l.b16 %v1804
    %v1973 = vunpack.c.h.b16 %v1804
    %v1974 = vunpack.c.l.b16 %v1805
    %v1975 = vunpack.c.h.b16 %v1805
    %v1976 = vunpack.c.l.b16 %v1806
    %v1977 = vunpack.c.h.b16 %v1806
    %v1978 = vunpack.c.l.b16 %v1807
    %v1979 = vunpack.c.h.b16 %v1807
    %v1980 = vunpack.c.l.b16 %v1808
    %v1981 = vunpack.c.h.b16 %v1808
    %v1982 = vunpack.c.l.b16 %v1809
    %v1983 = vunpack.c.h.b16 %v1809
    %v1984 = vunpack.c.l.b16 %v1810
    %v1985 = vunpack.c.h.b16 %v1810
    %v1986 = vunpack.c.l.b16 %v1811
    %v1987 = vunpack.c.h.b16 %v1811
    %v1988 = vunpack.c.l.b16 %v1812
    %v1989 = vunpack.c.h.b16 %v1812
    %v1990 = vunpack.c.l.b16 %v1813
    %v1991 = vunpack.c.h.b16 %v1813
    %v1992 = vunpack.c.l.b16 %v1814
    %v1993 = vunpack.c.h.b16 %v1814
    %v1994 = vunpack.c.l.b16 %v1815
    %v1995 = vunpack.c.h.b16 %v1815
    %v1996 = vunpack.c.l.b16 %v1816
    %v1997 = vunpack.c.h.b16 %v1816
    %v1998 = vunpack.c.l.b16 %v1817
    %v1999 = vunpack.c.h.b16 %v1817
    %v2000 = vunpack.c.l.b16 %v1818
    %v2001 = vunpack.c.h.b16 %v1818
    %v2002 = vunpack.c.l.b16 %v1819
    %v2003 = vunpack.c.h.b16 %v1819
    %v2004 = vunpack.c.l.b16 %v1820
    %v2005 = vunpack.c.h.b16 %v1820
    %v2006 = vunpack.c.l.b16 %v1821
    %v2007 = vunpack.c.h.b16 %v1821
    %v2008 = vunpack.c.l.b16 %v1822
    %v2009 = vunpack.c.h.b16 %v1822
    %v2010 = vunpack.c.l.b16 %v1823
    %v2011 = vunpack.c.h.b16 %v1823
    %v2012 = vunpack.c.l.b16 %v1824
    %v2013 = vunpack.c.h.b16 %v1824
    %v2014 = vunpack.c.l.b16 %v1825
    %v2015 = vunpack.c.h.b16 %v1825
    %v2016 = vunpack.c.l.b16 %v1826
    %v2017 = vunpack.c.h.b16 %v1826
    %v2018 = vunpack.c.l.b16 %v1827
    %v2019 = vunpack.c.h.b16 %v1827
    %v2020 = vunpack.c.l.b16 %v1828
    %v2021 = vunpack.c.h.b16 %v1828
    %v2022 = vunpack.c.l.b16 %v1829
    %v2023 = vunpack.c.h.b16 %v1829
    %v2024 = vunpack.c.l.b16 %v1830
    %v2025 = vunpack.c.h.b16 %v1830
    %v2026 = vunpack.c.l.b16 %v1831
    %v2027 = vunpack.c.h.b16 %v1831
    %v2028 = vunpack.c.l.b16 %v1832
    %v2029 = vunpack.c.h.b16 %v1832
    %v2030 = vunpack.c.l.b16 %v1833
    %v2031 = vunpack.c.h.b16 %v1833
    %v2032 = vpack.c.b16 %v1906, %v1904
    %v2033 = vpack.c.b16 %v1907, %v1905
    %v2034 = vpack.c.b16 %v1910, %v1908
    %v2035 = vpack.c.b16 %v1911, %v1909
    %v2036 = vpack.c.b16 %v1914, %v1912
    %v2037 = vpack.c.b16 %v1915, %v1913
    %v2038 = vpack.c.b16 %v1918, %v1916
    %v2039 = vpack.c.b16 %v1919, %v1917
    %v2040 = vpack.c.b16 %v1922, %v1920
    %v2041 = vpack.c.b16 %v1923, %v1921
    %v2042 = vpack.c.b16 %v1926, %v1924
    %v2043 = vpack.c.b16 %v1927, %v1925
    %v2044 = vpack.c.b16 %v1930, %v1928
    %v2045 = vpack.c.b16 %v1931, %v1929
    %v2046 = vpack.c.b16 %v1934, %v1932
    %v2047 = vpack.c.b16 %v1935, %v1933
    %v2048 = vpack.c.b16 %v1938, %v1936
    %v2049 = vpack.c.b16 %v1939, %v1937
    %v2050 = vpack.c.b16 %v1942, %v1940
    %v2051 = vpack.c.b16 %v1943, %v1941
    %v2052 = vpack.c.b16 %v1946, %v1944
    %v2053 = vpack.c.b16 %v1947, %v1945
    %v2054 = vpack.c.b16 %v1950, %v1948
    %v2055 = vpack.c.b16 %v1951, %v1949
    %v2056 = vpack.c.b16 %v1954, %v1952
    %v2057 = vpack.c.b16 %v1955, %v1953
    %v2058 = vpack.c.b16 %v1958, %v1956
    %v2059 = vpack.c.b16 %v1959, %v1957
    %v2060 = vpack.c.b16 %v1962, %v1960
    %v2061 = vpack.c.b16 %v1963, %v1961
    %v2062 = vpack.c.b16 %v1966, %v1964
    %v2063 = vpack.c.b16 %v1967, %v1965
    %v2064 = vpack.c.b16 %v1970, %v1968
    %v2065 = vpack.c.b16 %v1971, %v1969
    %v2066 = vpack.c.b16 %v1974, %v1972
    %v2067 = vpack.c.b16 %v1975, %v1973
    %v2068 = vpack.c.b16 %v1978, %v1976
    %v2069 = vpack.c.b16 %v1979, %v1977
    %v2070 = vpack.c.b16 %v1982, %v1980
    %v2071 = vpack.c.b16 %v1983, %v1981
    %v2072 = vpack.c.b16 %v1986, %v1984
    %v2073 = vpack.c.b16 %v1987, %v1985
    %v2074 = vpack.c.b16 %v1990, %v1988
    %v2075 = vpack.c.b16 %v1991, %v1989
    %v2076 = vpack.c.b16 %v1994, %v1992
    %v2077 = vpack.c.b16 %v1995, %v1993
    %v2078 = vpack.c.b16 %v1998, %v1996
    %v2079 = vpack.c.b16 %v1999, %v1997
    %v2080 = vpack.c.b16 %v2002, %v2000
    %v2081 = vpack.c.b16 %v2003, %v2001
    %v2082 = vpack.c.b16 %v2006, %v2004
    %v2083 = vpack.c.b16 %v2007, %v2005
    %v2084 = vpack.c.b16 %v2010, %v2008
    %v2085 = vpack.c.b16 %v2011, %v2009
    %v2086 = vpack.c.b16 %v2014, %v2012
    %v2087 = vpack.c.b16 %v2015, %v2013
    %v2088 = vpack.c.b16 %v2018, %v2016
    %v2089 = vpack.c.b16 %v2019, %v2017
    %v2090 = vpack.c.b16 %v2022, %v2020
    %v2091 = vpack.c.b16 %v2023, %v2021
    %v2092 = vpack.c.b16 %v2026, %v2024
    %v2093 = vpack.c.b16 %v2027, %v2025
    %v2094 = vpack.c.b16 %v2030, %v2028
    %v2095 = vpack.c.b16 %v2031, %v2029
    %2160 = vmatpush.bf16.msra.mxu0 %v2046
    %2161 = vmatpush.bf16.msra.mxu0 %v2044
    %2162 = vmatpush.bf16.msra.mxu0 %v2042
    %2163 = vmatpush.bf16.msra.mxu0 %v2040
    %2164 = vmatpush.bf16.msra.mxu0 %v2038
    %2165 = vmatpush.bf16.msra.mxu0 %v2036
    %2166 = vmatpush.bf16.msra.mxu0 %v2034
    %2167 = vmatpush.bf16.msra.mxu0 %v2032
    %2168 = vmatmul.bf16.gmra.mxu0 %v1766
    %v2169 = vpop.f32.mrf.mxu0
    %v2170 = vadd.f32 %v1836, %v2169
    %v2171 = vpop.f32.mrf.mxu0
    %2172 = vdwg.mxu0
    %2173 = vmatpush.bf16.msra.mxu0 %v2062
    %2174 = vmatpush.bf16.msra.mxu0 %v2060
    %2175 = vmatpush.bf16.msra.mxu0 %v2058
    %2176 = vmatpush.bf16.msra.mxu0 %v2056
    %2177 = vmatpush.bf16.msra.mxu0 %v2054
    %2178 = vmatpush.bf16.msra.mxu0 %v2052
    %2179 = vmatpush.bf16.msra.mxu0 %v2050
    %2180 = vmatpush.bf16.msra.mxu0 %v2048
    %2181 = vmatmul.bf16.gmra.mxu0 %v1767
    %v2182 = vpop.f32.mrf.mxu0
    %v2183 = vadd.f32 %v2170, %v2182
    %v2184 = vpop.f32.mrf.mxu0
    %2185 = vdwg.mxu0
    %2186 = vmatpush.bf16.msra.mxu0 %v2078
    %2187 = vmatpush.bf16.msra.mxu0 %v2076
    %2188 = vmatpush.bf16.msra.mxu0 %v2074
    %2189 = vmatpush.bf16.msra.mxu0 %v2072
    %2190 = vmatpush.bf16.msra.mxu0 %v2070
    %2191 = vmatpush.bf16.msra.mxu0 %v2068
    %2192 = vmatpush.bf16.msra.mxu0 %v2066
    %2193 = vmatpush.bf16.msra.mxu0 %v2064
    %2194 = vmatmul.bf16.gmra.mxu0 %v1768
    %v2195 = vpop.f32.mrf.mxu0
    %v2196 = vadd.f32 %v2183, %v2195
    %v2197 = vpop.f32.mrf.mxu0
    %2198 = vdwg.mxu0
    %2199 = vmatpush.bf16.msra.mxu0 %v2094
    %2200 = vmatpush.bf16.msra.mxu0 %v2092
    %2201 = vmatpush.bf16.msra.mxu0 %v2090
    %2202 = vmatpush.bf16.msra.mxu0 %v2088
    %2203 = vmatpush.bf16.msra.mxu0 %v2086
    %2204 = vmatpush.bf16.msra.mxu0 %v2084
    %2205 = vmatpush.bf16.msra.mxu0 %v2082
    %2206 = vmatpush.bf16.msra.mxu0 %v2080
    %2207 = vmatmul.bf16.gmra.mxu0 %v1769
    %v2208 = vpop.f32.mrf.mxu0
    %v2209 = vadd.f32 %v2196, %v2208
    %v2210 = vpop.f32.mrf.mxu0
    %2211 = vdwg.mxu0
    %2212 = vmatpush.bf16.msra.mxu0 %v2047
    %2213 = vmatpush.bf16.msra.mxu0 %v2045
    %2214 = vmatpush.bf16.msra.mxu0 %v2043
    %2215 = vmatpush.bf16.msra.mxu0 %v2041
    %2216 = vmatpush.bf16.msra.mxu0 %v2039
    %2217 = vmatpush.bf16.msra.mxu0 %v2037
    %2218 = vmatpush.bf16.msra.mxu0 %v2035
    %2219 = vmatpush.bf16.msra.mxu0 %v2033
    %2220 = vmatmul.bf16.gmra.mxu0 %v1766
    %v2221 = vpop.f32.mrf.mxu0
    %v2222 = vadd.f32 %v1837, %v2221
    %v2223 = vpop.f32.mrf.mxu0
    %2224 = vdwg.mxu0
    %2225 = vmatpush.bf16.msra.mxu0 %v2063
    %2226 = vmatpush.bf16.msra.mxu0 %v2061
    %2227 = vmatpush.bf16.msra.mxu0 %v2059
    %2228 = vmatpush.bf16.msra.mxu0 %v2057
    %2229 = vmatpush.bf16.msra.mxu0 %v2055
    %2230 = vmatpush.bf16.msra.mxu0 %v2053
    %2231 = vmatpush.bf16.msra.mxu0 %v2051
    %2232 = vmatpush.bf16.msra.mxu0 %v2049
    %2233 = vmatmul.bf16.gmra.mxu0 %v1767
    %v2234 = vpop.f32.mrf.mxu0
    %v2235 = vadd.f32 %v2222, %v2234
    %v2236 = vpop.f32.mrf.mxu0
    %2237 = vdwg.mxu0
    %2238 = vmatpush.bf16.msra.mxu0 %v2079
    %2239 = vmatpush.bf16.msra.mxu0 %v2077
    %2240 = vmatpush.bf16.msra.mxu0 %v2075
    %2241 = vmatpush.bf16.msra.mxu0 %v2073
    %2242 = vmatpush.bf16.msra.mxu0 %v2071
    %2243 = vmatpush.bf16.msra.mxu0 %v2069
    %2244 = vmatpush.bf16.msra.mxu0 %v2067
    %2245 = vmatpush.bf16.msra.mxu0 %v2065
    %2246 = vmatmul.bf16.gmra.mxu0 %v1768
    %v2247 = vpop.f32.mrf.mxu0
    %v2248 = vadd.f32 %v2235, %v2247
    %v2249 = vpop.f32.mrf.mxu0
    %2250 = vdwg.mxu0
    %2251 = vmatpush.bf16.msra.mxu0 %v2095
    %2252 = vmatpush.bf16.msra.mxu0 %v2093
    %2253 = vmatpush.bf16.msra.mxu0 %v2091
    %2254 = vmatpush.bf16.msra.mxu0 %v2089
    %2255 = vmatpush.bf16.msra.mxu0 %v2087
    %2256 = vmatpush.bf16.msra.mxu0 %v2085
    %2257 = vmatpush.bf16.msra.mxu0 %v2083
    %2258 = vmatpush.bf16.msra.mxu0 %v2081
    %2259 = vmatmul.bf16.gmra.mxu0 %v1769
    %v2260 = vpop.f32.mrf.mxu0
    %v2261 = vadd.f32 %v2248, %v2260
    %v2262 = vpop.f32.mrf.mxu0
    %2263 = vdwg.mxu0
    %v2264 = vmax.f32 %v2209, 0.0
    %v2265 = vmax.f32 %v2261, 0.0
    %v2266 = vand.u32 2147483647, %v2209
    %v2267 = vand.u32 2147483647, %v2261
    %v2268 = vsub.f32 0.0, %v2266
    %v2269 = vsub.f32 0.0, %v2267
    %v2270 = vmul.f32 %v2268, 1.442695
    %v2271 = vpow.pop %v2270
    %v2272 = vmul.f32 %v2269, 1.442695
    %v2273 = vpow.pop %v2272
    %v2274 = vadd.f32 %v2271, 1.0
    %v2275 = vlog2.pop %v2274
    %v2276 = vmul.f32 %v2275, 0.6931472
    %v2277 = vmul.f32 -0.5, %v2271
    %v2278 = vadd.f32 %v2277, 1.0
    %v2279 = vmul.f32 %v2278, %v2271
    %v2280 = vand.u32 2147483647, %v2271
    %vm2281 = vcmp.lt.f32.partialorder %v2280, 0.0004427343
    %v2282 = vsel %vm2281, %v2279, %v2276
    %v2283 = vadd.f32 %v2273, 1.0
    %v2284 = vlog2.pop %v2283
    %v2285 = vmul.f32 %v2284, 0.6931472
    %v2286 = vmul.f32 -0.5, %v2273
    %v2287 = vadd.f32 %v2286, 1.0
    %v2288 = vmul.f32 %v2287, %v2273
    %v2289 = vand.u32 2147483647, %v2273
    %vm2290 = vcmp.lt.f32.partialorder %v2289, 0.0004427343
    %v2291 = vsel %vm2290, %v2288, %v2285
    %v2292 = vadd.f32 %v2264, %v2282
    %v2293 = vadd.f32 %v2265, %v2291
    %v2294 = vpack.c.bf16 %v2292, %v2292
    %v2295 = vpack.c.bf16 %v2293, %v2293
    %v2296 = vld [vmem:[#allocation10] sm:$0xf]
    %v2297 = vld [vmem:[#allocation10 + $0x4] sm:$0xf]
    %v2298 = vld [vmem:[#allocation10 + $0x8] sm:$0xf]
    %v2299 = vld [vmem:[#allocation10 + $0xc] sm:$0xf]
    %v2300 = vld [vmem:[#allocation10 + $0x10] sm:$0xf]
    %v2301 = vld [vmem:[#allocation10 + $0x14] sm:$0xf]
    %v2302 = vld [vmem:[#allocation10 + $0x18] sm:$0xf]
    %v2303 = vld [vmem:[#allocation10 + $0x1c] sm:$0xf]
    %v2304 = vld [vmem:[#allocation10 + $0x20] sm:$0xf]
    %v2305 = vld [vmem:[#allocation10 + $0x24] sm:$0xf]
    %v2306 = vld [vmem:[#allocation10 + $0x28] sm:$0xf]
    %v2307 = vld [vmem:[#allocation10 + $0x2c] sm:$0xf]
    %v2308 = vld [vmem:[#allocation10 + $0x30] sm:$0xf]
    %v2309 = vld [vmem:[#allocation10 + $0x34] sm:$0xf]
    %v2310 = vld [vmem:[#allocation10 + $0x38] sm:$0xf]
    %v2311 = vld [vmem:[#allocation10 + $0x3c] sm:$0xf]
    %v2312 = vld [vmem:[#allocation10 + $0x40] sm:$0xf]
    %v2313 = vld [vmem:[#allocation10 + $0x44] sm:$0xf]
    %v2314 = vld [vmem:[#allocation10 + $0x48] sm:$0xf]
    %v2315 = vld [vmem:[#allocation10 + $0x4c] sm:$0xf]
    %v2316 = vld [vmem:[#allocation10 + $0x50] sm:$0xf]
    %v2317 = vld [vmem:[#allocation10 + $0x54] sm:$0xf]
    %v2318 = vld [vmem:[#allocation10 + $0x58] sm:$0xf]
    %v2319 = vld [vmem:[#allocation10 + $0x5c] sm:$0xf]
    %v2320 = vld [vmem:[#allocation10 + $0x60] sm:$0xf]
    %v2321 = vld [vmem:[#allocation10 + $0x64] sm:$0xf]
    %v2322 = vld [vmem:[#allocation10 + $0x68] sm:$0xf]
    %v2323 = vld [vmem:[#allocation10 + $0x6c] sm:$0xf]
    %v2324 = vld [vmem:[#allocation10 + $0x70] sm:$0xf]
    %v2325 = vld [vmem:[#allocation10 + $0x74] sm:$0xf]
    %v2326 = vld [vmem:[#allocation10 + $0x78] sm:$0xf]
    %v2327 = vld [vmem:[#allocation10 + $0x7c] sm:$0xf]
    %v2328 = vld [vmem:[%s6] sm:$0x1]
    %v2330 = vperm.slane %v2328, 0
    %v2364 = vunpack.c.l.b16 %v2296
    %v2365 = vunpack.c.l.b16 %v2297
    %v2366 = vunpack.c.l.b16 %v2298
    %v2367 = vunpack.c.l.b16 %v2299
    %v2368 = vunpack.c.l.b16 %v2300
    %v2369 = vunpack.c.l.b16 %v2301
    %v2370 = vunpack.c.l.b16 %v2302
    %v2371 = vunpack.c.l.b16 %v2303
    %v2372 = vunpack.c.l.b16 %v2304
    %v2373 = vunpack.c.l.b16 %v2305
    %v2374 = vunpack.c.l.b16 %v2306
    %v2375 = vunpack.c.l.b16 %v2307
    %v2376 = vunpack.c.l.b16 %v2308
    %v2377 = vunpack.c.l.b16 %v2309
    %v2378 = vunpack.c.l.b16 %v2310
    %v2379 = vunpack.c.l.b16 %v2311
    %v2380 = vunpack.c.l.b16 %v2312
    %v2381 = vunpack.c.l.b16 %v2313
    %v2382 = vunpack.c.l.b16 %v2314
    %v2383 = vunpack.c.l.b16 %v2315
    %v2384 = vunpack.c.l.b16 %v2316
    %v2385 = vunpack.c.l.b16 %v2317
    %v2386 = vunpack.c.l.b16 %v2318
    %v2387 = vunpack.c.l.b16 %v2319
    %v2388 = vunpack.c.l.b16 %v2320
    %v2389 = vunpack.c.l.b16 %v2321
    %v2390 = vunpack.c.l.b16 %v2322
    %v2391 = vunpack.c.l.b16 %v2323
    %v2392 = vunpack.c.l.b16 %v2324
    %v2393 = vunpack.c.l.b16 %v2325
    %v2394 = vunpack.c.l.b16 %v2326
    %v2395 = vunpack.c.l.b16 %v2327
    %v2396 = vpack.c.b16 %v2365, %v2364
    %v2397 = vpack.c.b16 %v2367, %v2366
    %v2398 = vpack.c.b16 %v2369, %v2368
    %v2399 = vpack.c.b16 %v2371, %v2370
    %v2400 = vpack.c.b16 %v2373, %v2372
    %v2401 = vpack.c.b16 %v2375, %v2374
    %v2402 = vpack.c.b16 %v2377, %v2376
    %v2403 = vpack.c.b16 %v2379, %v2378
    %v2404 = vpack.c.b16 %v2381, %v2380
    %v2405 = vpack.c.b16 %v2383, %v2382
    %v2406 = vpack.c.b16 %v2385, %v2384
    %v2407 = vpack.c.b16 %v2387, %v2386
    %v2408 = vpack.c.b16 %v2389, %v2388
    %v2409 = vpack.c.b16 %v2391, %v2390
    %v2410 = vpack.c.b16 %v2393, %v2392
    %v2411 = vpack.c.b16 %v2395, %v2394
    %2428 = vmatpush.bf16.msra.mxu0 %v2403
    %2429 = vmatpush.bf16.msra.mxu0 %v2402
    %2430 = vmatpush.bf16.msra.mxu0 %v2401
    %2431 = vmatpush.bf16.msra.mxu0 %v2400
    %2432 = vmatpush.bf16.msra.mxu0 %v2399
    %2433 = vmatpush.bf16.msra.mxu0 %v2398
    %2434 = vmatpush.bf16.msra.mxu0 %v2397
    %2435 = vmatpush.bf16.msra.mxu0 %v2396
    %2436 = vmatmul.bf16.gmra.mxu0 %v2294
    %v2437 = vpop.f32.mrf.mxu0
    %v2438 = vadd.f32 %v2330, %v2437
    %v2439 = vpop.f32.mrf.mxu0
    %2440 = vdwg.mxu0
    %2441 = vmatpush.bf16.msra.mxu0 %v2411
    %2442 = vmatpush.bf16.msra.mxu0 %v2410
    %2443 = vmatpush.bf16.msra.mxu0 %v2409
    %2444 = vmatpush.bf16.msra.mxu0 %v2408
    %2445 = vmatpush.bf16.msra.mxu0 %v2407
    %2446 = vmatpush.bf16.msra.mxu0 %v2406
    %2447 = vmatpush.bf16.msra.mxu0 %v2405
    %2448 = vmatpush.bf16.msra.mxu0 %v2404
    %2449 = vmatmul.bf16.gmra.mxu0 %v2295
    %v2450 = vpop.f32.mrf.mxu0
    %v2451 = vadd.f32 %v2438, %v2450
    %v2452 = vpop.f32.mrf.mxu0
    %2453 = vdwg.mxu0
    %v2454 = vmax.f32 %v2451, 0.0
    %v2455 = vand.u32 2147483647, %v2451
    %v2456 = vsub.f32 0.0, %v2455
    %v2457 = vmul.f32 %v2456, 1.442695
    %v2458 = vpow.pop %v2457
    %v2459 = vadd.f32 %v2458, 1.0
    %v2460 = vlog2.pop %v2459
    %v2461 = vmul.f32 %v2460, 0.6931472
    %v2462 = vmul.f32 -0.5, %v2458
    %v2463 = vadd.f32 %v2462, 1.0
    %v2464 = vmul.f32 %v2463, %v2458
    %v2465 = vand.u32 2147483647, %v2458
    %vm2466 = vcmp.lt.f32.partialorder %v2465, 0.0004427343
    %v2467 = vsel %vm2466, %v2464, %v2461
    %v2468 = vadd.f32 %v2454, %v2467
    %v2469 = vpack.c.bf16 %v2468, %v2468
    %v2470 = vld [vmem:[#allocation11] sm:$0xf]
    %v2471 = vld [vmem:[#allocation11 + $0x4] sm:$0xf]
    %v2472 = vld [vmem:[#allocation11 + $0x8] sm:$0xf]
    %v2473 = vld [vmem:[#allocation11 + $0xc] sm:$0xf]
    %v2474 = vld [vmem:[#allocation11 + $0x10] sm:$0xf]
    %v2475 = vld [vmem:[#allocation11 + $0x14] sm:$0xf]
    %v2476 = vld [vmem:[#allocation11 + $0x18] sm:$0xf]
    %v2477 = vld [vmem:[#allocation11 + $0x1c] sm:$0xf]
    %v2478 = vld [vmem:[#allocation11 + $0x20] sm:$0xf]
    %v2479 = vld [vmem:[#allocation11 + $0x24] sm:$0xf]
    %v2480 = vld [vmem:[#allocation11 + $0x28] sm:$0xf]
    %v2481 = vld [vmem:[#allocation11 + $0x2c] sm:$0xf]
    %v2482 = vld [vmem:[#allocation11 + $0x30] sm:$0xf]
    %v2483 = vld [vmem:[#allocation11 + $0x34] sm:$0xf]
    %v2484 = vld [vmem:[#allocation11 + $0x38] sm:$0xf]
    %v2485 = vld [vmem:[#allocation11 + $0x3c] sm:$0xf]
    %v2486 = vld [vmem:[%s8] sm:$0x1]
    %v2488 = vperm.slane %v2486, 0
    %v2506 = vunpack.c.l.b16 %v2470
    %v2507 = vunpack.c.l.b16 %v2471
    %v2508 = vunpack.c.l.b16 %v2472
    %v2509 = vunpack.c.l.b16 %v2473
    %v2510 = vunpack.c.l.b16 %v2474
    %v2511 = vunpack.c.l.b16 %v2475
    %v2512 = vunpack.c.l.b16 %v2476
    %v2513 = vunpack.c.l.b16 %v2477
    %v2514 = vunpack.c.l.b16 %v2478
    %v2515 = vunpack.c.l.b16 %v2479
    %v2516 = vunpack.c.l.b16 %v2480
    %v2517 = vunpack.c.l.b16 %v2481
    %v2518 = vunpack.c.l.b16 %v2482
    %v2519 = vunpack.c.l.b16 %v2483
    %v2520 = vunpack.c.l.b16 %v2484
    %v2521 = vunpack.c.l.b16 %v2485
    %v2522 = vpack.c.b16 %v2507, %v2506
    %v2523 = vpack.c.b16 %v2509, %v2508
    %v2524 = vpack.c.b16 %v2511, %v2510
    %v2525 = vpack.c.b16 %v2513, %v2512
    %v2526 = vpack.c.b16 %v2515, %v2514
    %v2527 = vpack.c.b16 %v2517, %v2516
    %v2528 = vpack.c.b16 %v2519, %v2518
    %v2529 = vpack.c.b16 %v2521, %v2520
    %2538 = vmatpush.bf16.msra.mxu0 %v2529
    %2539 = vmatpush.bf16.msra.mxu0 %v2528
    %2540 = vmatpush.bf16.msra.mxu0 %v2527
    %2541 = vmatpush.bf16.msra.mxu0 %v2526
    %2542 = vmatpush.bf16.msra.mxu0 %v2525
    %2543 = vmatpush.bf16.msra.mxu0 %v2524
    %2544 = vmatpush.bf16.msra.mxu0 %v2523
    %2545 = vmatpush.bf16.msra.mxu0 %v2522
    %2546 = vmatmul.bf16.gmra.mxu0 %v2469
    %v2547 = vpop.f32.mrf.mxu0
    %v2548 = vadd.f32 %v2488, %v2547
    %v2549 = vpop.f32.mrf.mxu0
    %2550 = vdwg.mxu0
    %2551 = vst [vmem:[#allocation13] sm:$0xff] %v2548
    // Predicated region
    $region62: #{tpu_custom_call.1} parent=1 // pred_check
      _
    $region63: #{tpu_custom_call.1} parent=1 // pred_check_branch
      %2553 = sbr.rel (0) target = $region65
    $region64: #{tpu_custom_call.1} parent=1 // pred_region
      %2555 = vsyncadd [#allocation4], 0
      %s2557 = sshll.u32 [#allocation13], 4
      %s2558 = int_to_ptr.vmem [resolvable:$true] %s2557
      %s2559 = sshll.u32 %s9, 4
      %s2560 = int_to_ptr.hbm [resolvable:$true] %s2559
      %2562 = dma.vmem_to_hbm [thread:$0]  %s2558, 128, %s2560, [#allocation4]
    $region65: #{tpu_custom_call.1} parent=1 // pred_fallthru
      _
    // Predicated region
    $region66: #{tpu_custom_call.1} parent=1 // pred_check
      _
    $region67: #{tpu_custom_call.1} parent=1 // pred_check_branch
      %2564 = sbr.rel (0) target = $region69
    $region68: #{tpu_custom_call.1} parent=1 // pred_region
      %2566 = dma.done [#allocation4], 128
    $region69: #{tpu_custom_call.1} parent=1 // pred_fallthru
      _
    %2567 = vsyncpa [#allocation3], 1
    %2568 = vsyncpa [#allocation6], 1
    %2569 = vsyncpa [#allocation9], 1
    %2570 = vsyncpa [#allocation12], 1
    %2571 = vsyncpa [#allocation4], 1

</llo_original>
